<compile_context>
chip_gen: v6e
topology: v6e:2x2x1
jax: 0.10.0
libtpu: 0.0.40
codegen_flags: <defaults>
</compile_context>

<pallas_src>
import jax
import jax.numpy as jnp
import numpy as np
from jax import lax
from jax.experimental import pallas as pl
from jax.experimental.pallas import tpu as pltpu


def _round_up(x, m):
    return (x + m - 1) // m * m


def lstm_tagger_kernel(ids_ref,    # VMEM (T, 1)     int32 token ids
                       emb_ref,    # VMEM (V, E)     bf16 embedding table
                       wih_ref,    # VMEM (E, 4*HP)  bf16 padded W_ih^T (i,f,o,g)
                       whh_ref,    # VMEM (HP, 4*HP) bf16 padded W_hh^T (i,f,o,g)
                       bias_ref,   # VMEM (1, 4*HP)  f32 padded (b_ih + b_hh)
                       wtag_ref,   # VMEM (HP, TAGP) f32 padded W_tag^T
                       btag_ref,   # VMEM (1, TAGP)  f32 padded b_tag (-1e30 pads)
                       o_ref,      # VMEM (T, TAGP)  f32 log-probs (lane-padded)
                       gx_scr,     # VMEM (T, 4*HP)  f32 hoisted input projection
                       h_scr):     # VMEM (T, HP)    f32 all hidden states
    T, HP = h_scr.shape
    V = emb_ref.shape[0]
    SIG = 3 * HP        # i|f|o sigmoid block; tanh gate g is the last HP lanes
    bf16 = jnp.bfloat16
    f32 = jnp.float32

    # ---- Embedding lookup as a one-hot matmul (no DMAs, no dynamic slicing) --
    ids = ids_ref[...]                                             # (T, 1) int32
    iota = lax.broadcasted_iota(jnp.int32, (T, V), 1)
    onehot = jnp.where(ids == iota, 1.0, 0.0).astype(bf16)         # (T, V)
    x = jnp.dot(onehot, emb_ref[...], preferred_element_type=f32)  # (T, E)

    # ---- Input projection hoisted out of the recurrence, parked in VMEM ----
    gx_scr[...] = (jnp.dot(x.astype(bf16), wih_ref[...],
                           preferred_element_type=f32)
                   + bias_ref[...])                                # (T, 4*HP)

    # ---- Fully-unrolled recurrence: h/c stay in vregs; W_hh^T read per step
    #      from VMEM (no whole-weight hoist -> no vreg-file blowout / spills).
    # TODO(synk): further refinement: explicit MXU weight staging
    # (pltpu.matmul_push_rhs once + matmul_acc_lhs/matmul_pop per step) so the
    # recurrent weight is pushed into the systolic array only once for all T.
    h = jnp.zeros((1, HP), f32)
    c = jnp.zeros((1, HP), f32)
    for t in range(T):                                   # static trip count
        gates = gx_scr[pl.ds(t, 1), :] + jnp.dot(
            h.astype(bf16), whh_ref[...], preferred_element_type=f32)
        sig = jax.nn.sigmoid(gates[:, :SIG])             # i|f|o in one wide pass
        i_g = sig[:, 0 * HP:1 * HP]
        f_g = sig[:, 1 * HP:2 * HP]
        o_g = sig[:, 2 * HP:3 * HP]
        g_g = jnp.tanh(gates[:, SIG:])
        c = f_g * c + i_g * g_g
        h = o_g * jnp.tanh(c)
        h_scr[pl.ds(t, 1), :] = h                        # store off the dep chain

    # ---- hidden2tag + log_softmax(dim=1), kept in f32 ----
    tag_space = (jnp.dot(h_scr[...], wtag_ref[...], preferred_element_type=f32)
                 + btag_ref[...])                        # (T, TAGP)
    m = jnp.max(tag_space, axis=1, keepdims=True)
    z = tag_space - m
    o_ref[...] = z - jnp.log(jnp.sum(jnp.exp(z), axis=1, keepdims=True))


def lstm_tagger_forward(ids, emb, w_ih, w_hh, b_ih, b_hh, w_tag, b_tag):
    """ids: (T,) int32. Weights in PyTorch conventions:
       w_ih (4H, E), w_hh (4H, H), b_ih/b_hh (4H,), w_tag (Tag, H), b_tag (Tag,)."""
    T = ids.shape[0]
    H = w_hh.shape[1]
    E = emb.shape[1]
    TAGS = w_tag.shape[0]
    HP = max(128, _round_up(H, 128))       # lane-aligned hidden dim
    TAGP = max(128, _round_up(TAGS, 128))  # lane-aligned tag dim
    f32, bf16 = jnp.float32, jnp.bfloat16

    # PyTorch gate order (i, f, g, o) -> (i, f, o, g) so sigmoids are contiguous.
    perm = jnp.array([0, 1, 3, 2], jnp.int32)

    # Per-gate zero padding keeps padded gate pre-activations exactly 0.
    wih_t = jnp.transpose(w_ih).astype(f32).reshape(E, 4, H)[:, perm, :]
    wih_p = jnp.pad(wih_t, ((0, 0), (0, 0), (0, HP - H))).reshape(E, 4 * HP).astype(bf16)

    whh_t = jnp.transpose(w_hh).astype(f32).reshape(H, 4, H)[:, perm, :]
    whh_p = jnp.pad(whh_t, ((0, HP - H), (0, 0), (0, HP - H))).reshape(HP, 4 * HP).astype(bf16)

    bias = (b_ih + b_hh).astype(f32).reshape(4, H)[perm, :]
    bias_p = jnp.pad(bias, ((0, 0), (0, HP - H))).reshape(1, 4 * HP)        # f32

    wtag_p = jnp.pad(jnp.transpose(w_tag).astype(f32),
                     ((0, HP - H), (0, TAGP - TAGS)))                       # (HP, TAGP)
    # Padded tag logits forced to -1e30 (f32) so they vanish under log_softmax.
    btag_p = jnp.full((1, TAGP), -1e30, f32).at[0, :TAGS].set(b_tag.astype(f32))

    ids2d = ids.astype(jnp.int32).reshape(T, 1)
    emb_b = emb.astype(bf16)

    vmem = pl.BlockSpec(memory_space=pltpu.MemorySpace.VMEM)

    # TODO(synk): if many sentences are processed per call, add a leading
    # "parallel" grid axis over sentences (dimension_semantics=("parallel",...))
    # with constant-index weight BlockSpecs so v7x's second TensorCore is used
    # and per-call launch overhead amortizes; this forward is single-sentence.
    out = pl.pallas_call(
        lstm_tagger_kernel,
        out_shape=jax.ShapeDtypeStruct((T, TAGP), f32),
        in_specs=[vmem, vmem, vmem, vmem, vmem, vmem, vmem],
        out_specs=vmem,
        scratch_shapes=[
            pltpu.VMEM((T, 4 * HP), f32),   # hoisted input projection rows
            pltpu.VMEM((T, HP), f32),       # hidden states for the final matmul
        ],
    )(ids2d, emb_b, wih_p, whh_p, bias_p, wtag_p, btag_p)

    return out[:, :TAGS]


def reference_forward(ids, emb, w_ih, w_hh, b_ih, b_hh, w_tag, b_tag):
    """Pure-JAX f32 reference mirroring nn.Embedding -> nn.LSTM -> nn.Linear -> log_softmax."""
    H = w_hh.shape[1]
    x_seq = emb[ids]                                          # (T, E)

    def step(carry, x_t):
        h, c = carry
        gates = x_t @ w_ih.T + h @ w_hh.T + b_ih + b_hh
        i_g = jax.nn.sigmoid(gates[0 * H:1 * H])
        f_g = jax.nn.sigmoid(gates[1 * H:2 * H])
        g_g = jnp.tanh(gates[2 * H:3 * H])
        o_g = jax.nn.sigmoid(gates[3 * H:4 * H])
        c_new = f_g * c + i_g * g_g
        h_new = o_g * jnp.tanh(c_new)
        return (h_new, c_new), h_new

    h0 = jnp.zeros((H,), jnp.float32)
    c0 = jnp.zeros((H,), jnp.float32)
    _, hs = lax.scan(step, (h0, c0), x_seq)                   # (T, H)
    tag_space = hs @ w_tag.T + b_tag
    return jax.nn.log_softmax(tag_space, axis=1)


if __name__ == "__main__":
    # Small shapes consistent with the module's forward (batch=1, seq-major).
    T = 8            # sentence length
    E = 32           # embedding_dim
    H = 32           # hidden_dim
    VOCAB = 16       # vocab_size
    TAGS = 8         # tagset_size

    key = jax.random.PRNGKey(0)
    k = jax.random.split(key, 8)

    emb = jax.random.normal(k[0], (VOCAB, E), jnp.float32)                      # like nn.Embedding
    bound = 1.0 / np.sqrt(H)
    w_ih = jax.random.uniform(k[1], (4 * H, E), jnp.float32, -bound, bound)
    w_hh = jax.random.uniform(k[2], (4 * H, H), jnp.float32, -bound, bound)
    b_ih = jax.random.uniform(k[3], (4 * H,), jnp.float32, -bound, bound)
    b_hh = jax.random.uniform(k[4], (4 * H,), jnp.float32, -bound, bound)
    w_tag = jax.random.uniform(k[5], (TAGS, H), jnp.float32, -bound, bound)
    b_tag = jax.random.uniform(k[6], (TAGS,), jnp.float32, -bound, bound)

    sentence = jax.random.randint(k[7], (T,), 0, VOCAB, jnp.int32)

    out = lstm_tagger_forward(sentence, emb, w_ih, w_hh, b_ih, b_hh, w_tag, b_tag)
    out = jax.block_until_ready(out)

    ref = reference_forward(sentence, emb, w_ih, w_hh, b_ih, b_hh, w_tag, b_tag)
    # Tolerance relaxed vs the pure-f32 version because embedding / LSTM matmul
    # operands are bf16 (f32 accumulation); observed error is O(1e-3), well
    # inside 2e-2.
    np.testing.assert_allclose(np.asarray(out), np.asarray(ref), rtol=2e-2, atol=2e-2)

    print("KERNEL_OK")
</pallas_src>

<mosaic_0001>
module attributes {stable_mosaic.version = 11 : i64} {
  func.func @lstm_tagger_kernel(%arg0: memref<8x1xi32, #tpu.memory_space<vmem>>, %arg1: memref<16x32xbf16, #tpu.memory_space<vmem>>, %arg2: memref<32x512xbf16, #tpu.memory_space<vmem>>, %arg3: memref<128x512xbf16, #tpu.memory_space<vmem>>, %arg4: memref<1x512xf32, #tpu.memory_space<vmem>>, %arg5: memref<128x128xf32, #tpu.memory_space<vmem>>, %arg6: memref<1x128xf32, #tpu.memory_space<vmem>>, %arg7: memref<8x128xf32, #tpu.memory_space<vmem>>, %arg8: memref<8x512xf32, #tpu.memory_space<vmem>>, %arg9: memref<8x128xf32, #tpu.memory_space<vmem>>) attributes {dimension_semantics = [], scalar_prefetch = 0 : i64, scratch_operands = 2 : i64, tpu.core_type = #tpu.core_type<tc>} {
    %c0 = arith.constant 0 : index
    %c0_0 = arith.constant 0 : index
    %0 = vector.load %arg0[%c0, %c0_0] : memref<8x1xi32, #tpu.memory_space<vmem>>, vector<8x1xi32>
    %1 = tpu.iota {dimensions = array<i32: 1>} : vector<8x16xi32>
    %2 = vector.broadcast %0 : vector<8x1xi32> to vector<8x16xi32>
    %3 = arith.cmpi eq, %2, %1 : vector<8x16xi32>
    %cst = arith.constant 1.000000e+00 : f32
    %cst_1 = arith.constant 0.000000e+00 : f32
    %4 = vector.broadcast %cst : f32 to vector<8x16xf32>
    %5 = vector.broadcast %cst_1 : f32 to vector<8x16xf32>
    %6 = arith.select %3, %4, %5 : vector<8x16xi1>, vector<8x16xf32>
    %7 = arith.truncf %6 : vector<8x16xf32> to vector<8x16xbf16>
    %c0_2 = arith.constant 0 : index
    %c0_3 = arith.constant 0 : index
    %8 = vector.load %arg1[%c0_2, %c0_3] : memref<16x32xbf16, #tpu.memory_space<vmem>>, vector<16x32xbf16>
    %cst_4 = arith.constant dense<0.000000e+00> : vector<8x32xf32>
    %9 = tpu.matmul %7, %8, %cst_4 {dimension_numbers = #tpu.dot_dimension_numbers<[1], [0], [0], [1], [0, 0, 1, 1], [], []>} : vector<8x16xbf16>, vector<16x32xbf16>, vector<8x32xf32> -> vector<8x32xf32>
    %10 = arith.truncf %9 : vector<8x32xf32> to vector<8x32xbf16>
    %c0_5 = arith.constant 0 : index
    %c0_6 = arith.constant 0 : index
    %11 = vector.load %arg2[%c0_5, %c0_6] : memref<32x512xbf16, #tpu.memory_space<vmem>>, vector<32x512xbf16>
    %cst_7 = arith.constant dense<0.000000e+00> : vector<8x512xf32>
    %12 = tpu.matmul %10, %11, %cst_7 {dimension_numbers = #tpu.dot_dimension_numbers<[1], [0], [0], [1], [0, 0, 1, 1], [], []>} : vector<8x32xbf16>, vector<32x512xbf16>, vector<8x512xf32> -> vector<8x512xf32>
    %c0_8 = arith.constant 0 : index
    %c0_9 = arith.constant 0 : index
    %13 = vector.load %arg4[%c0_8, %c0_9] : memref<1x512xf32, #tpu.memory_space<vmem>>, vector<1x512xf32>
    %14 = vector.broadcast %13 : vector<1x512xf32> to vector<8x512xf32>
    %15 = arith.addf %12, %14 : vector<8x512xf32>
    %c0_10 = arith.constant 0 : index
    %c0_11 = arith.constant 0 : index
    %16 = vector.load %arg8[%c0_10, %c0_11] : memref<8x512xf32, #tpu.memory_space<vmem>>, vector<8x512xf32>
    tpu.vector_store %arg8[%c0_10, %c0_11], %15 {strides = array<i32>} : memref<8x512xf32, #tpu.memory_space<vmem>>, vector<8x512xf32>,
    %cst_12 = arith.constant 0.000000e+00 : f32
    %17 = vector.broadcast %cst_12 : f32 to vector<1x128xf32>
    %cst_13 = arith.constant 0.000000e+00 : f32
    %18 = vector.broadcast %cst_13 : f32 to vector<1x128xf32>
    %c0_14 = arith.constant 0 : index
    %c0_15 = arith.constant 0 : index
    %19 = vector.load %arg8[%c0_14, %c0_15] : memref<8x512xf32, #tpu.memory_space<vmem>>, vector<1x512xf32>
    %20 = arith.truncf %17 : vector<1x128xf32> to vector<1x128xbf16>
    %c0_16 = arith.constant 0 : index
    %c0_17 = arith.constant 0 : index
    %21 = vector.load %arg3[%c0_16, %c0_17] : memref<128x512xbf16, #tpu.memory_space<vmem>>, vector<128x512xbf16>
    %cst_18 = arith.constant dense<0.000000e+00> : vector<1x512xf32>
    %22 = tpu.matmul %20, %21, %cst_18 {dimension_numbers = #tpu.dot_dimension_numbers<[1], [0], [0], [1], [0, 0, 1, 1], [], []>} : vector<1x128xbf16>, vector<128x512xbf16>, vector<1x512xf32> -> vector<1x512xf32>
    %23 = arith.addf %19, %22 : vector<1x512xf32>
    %24 = vector.extract_strided_slice %23 {offsets = [0, 0], sizes = [1, 384], strides = [1, 1]} : vector<1x512xf32> to vector<1x384xf32>
    %25 = arith.negf %24 : vector<1x384xf32>
    %26 = math.exp %25 : vector<1x384xf32>
    %cst_19 = arith.constant 1.000000e+00 : f32
    %27 = vector.broadcast %cst_19 : f32 to vector<1x384xf32>
    %28 = arith.addf %27, %26 : vector<1x384xf32>
    %29 = arith.divf %27, %28 : vector<1x384xf32>
    %30 = vector.extract_strided_slice %29 {offsets = [0, 0], sizes = [1, 128], strides = [1, 1]} : vector<1x384xf32> to vector<1x128xf32>
    %31 = vector.extract_strided_slice %29 {offsets = [0, 128], sizes = [1, 128], strides = [1, 1]} : vector<1x384xf32> to vector<1x128xf32>
    %32 = vector.extract_strided_slice %29 {offsets = [0, 256], sizes = [1, 128], strides = [1, 1]} : vector<1x384xf32> to vector<1x128xf32>
    %33 = vector.extract_strided_slice %23 {offsets = [0, 384], sizes = [1, 128], strides = [1, 1]} : vector<1x512xf32> to vector<1x128xf32>
    %34 = math.tanh %33 : vector<1x128xf32>
    %35 = arith.mulf %31, %18 : vector<1x128xf32>
    %36 = arith.mulf %30, %34 : vector<1x128xf32>
    %37 = arith.addf %35, %36 : vector<1x128xf32>
    %38 = math.tanh %37 : vector<1x128xf32>
    %39 = arith.mulf %32, %38 : vector<1x128xf32>
    %c0_20 = arith.constant 0 : index
    %c0_21 = arith.constant 0 : index
    %40 = vector.load %arg9[%c0_20, %c0_21] : memref<8x128xf32, #tpu.memory_space<vmem>>, vector<1x128xf32>
    tpu.vector_store %arg9[%c0_20, %c0_21], %39 {strides = array<i32>} : memref<8x128xf32, #tpu.memory_space<vmem>>, vector<1x128xf32>,
    %c1 = arith.constant 1 : index
    %c0_22 = arith.constant 0 : index
    %41 = vector.load %arg8[%c1, %c0_22] : memref<8x512xf32, #tpu.memory_space<vmem>>, vector<1x512xf32>
    %42 = arith.truncf %39 : vector<1x128xf32> to vector<1x128xbf16>
    %c0_23 = arith.constant 0 : index
    %c0_24 = arith.constant 0 : index
    %43 = vector.load %arg3[%c0_23, %c0_24] : memref<128x512xbf16, #tpu.memory_space<vmem>>, vector<128x512xbf16>
    %cst_25 = arith.constant dense<0.000000e+00> : vector<1x512xf32>
    %44 = tpu.matmul %42, %43, %cst_25 {dimension_numbers = #tpu.dot_dimension_numbers<[1], [0], [0], [1], [0, 0, 1, 1], [], []>} : vector<1x128xbf16>, vector<128x512xbf16>, vector<1x512xf32> -> vector<1x512xf32>
    %45 = arith.addf %41, %44 : vector<1x512xf32>
    %46 = vector.extract_strided_slice %45 {offsets = [0, 0], sizes = [1, 384], strides = [1, 1]} : vector<1x512xf32> to vector<1x384xf32>
    %47 = arith.negf %46 : vector<1x384xf32>
    %48 = math.exp %47 : vector<1x384xf32>
    %cst_26 = arith.constant 1.000000e+00 : f32
    %49 = vector.broadcast %cst_26 : f32 to vector<1x384xf32>
    %50 = arith.addf %49, %48 : vector<1x384xf32>
    %51 = arith.divf %49, %50 : vector<1x384xf32>
    %52 = vector.extract_strided_slice %51 {offsets = [0, 0], sizes = [1, 128], strides = [1, 1]} : vector<1x384xf32> to vector<1x128xf32>
    %53 = vector.extract_strided_slice %51 {offsets = [0, 128], sizes = [1, 128], strides = [1, 1]} : vector<1x384xf32> to vector<1x128xf32>
    %54 = vector.extract_strided_slice %51 {offsets = [0, 256], sizes = [1, 128], strides = [1, 1]} : vector<1x384xf32> to vector<1x128xf32>
    %55 = vector.extract_strided_slice %45 {offsets = [0, 384], sizes = [1, 128], strides = [1, 1]} : vector<1x512xf32> to vector<1x128xf32>
    %56 = math.tanh %55 : vector<1x128xf32>
    %57 = arith.mulf %53, %37 : vector<1x128xf32>
    %58 = arith.mulf %52, %56 : vector<1x128xf32>
    %59 = arith.addf %57, %58 : vector<1x128xf32>
    %60 = math.tanh %59 : vector<1x128xf32>
    %61 = arith.mulf %54, %60 : vector<1x128xf32>
    %c1_27 = arith.constant 1 : index
    %c0_28 = arith.constant 0 : index
    %62 = vector.load %arg9[%c1_27, %c0_28] : memref<8x128xf32, #tpu.memory_space<vmem>>, vector<1x128xf32>
    tpu.vector_store %arg9[%c1_27, %c0_28], %61 {strides = array<i32>} : memref<8x128xf32, #tpu.memory_space<vmem>>, vector<1x128xf32>,
    %c2 = arith.constant 2 : index
    %c0_29 = arith.constant 0 : index
    %63 = vector.load %arg8[%c2, %c0_29] : memref<8x512xf32, #tpu.memory_space<vmem>>, vector<1x512xf32>
    %64 = arith.truncf %61 : vector<1x128xf32> to vector<1x128xbf16>
    %c0_30 = arith.constant 0 : index
    %c0_31 = arith.constant 0 : index
    %65 = vector.load %arg3[%c0_30, %c0_31] : memref<128x512xbf16, #tpu.memory_space<vmem>>, vector<128x512xbf16>
    %cst_32 = arith.constant dense<0.000000e+00> : vector<1x512xf32>
    %66 = tpu.matmul %64, %65, %cst_32 {dimension_numbers = #tpu.dot_dimension_numbers<[1], [0], [0], [1], [0, 0, 1, 1], [], []>} : vector<1x128xbf16>, vector<128x512xbf16>, vector<1x512xf32> -> vector<1x512xf32>
    %67 = arith.addf %63, %66 : vector<1x512xf32>
    %68 = vector.extract_strided_slice %67 {offsets = [0, 0], sizes = [1, 384], strides = [1, 1]} : vector<1x512xf32> to vector<1x384xf32>
    %69 = arith.negf %68 : vector<1x384xf32>
    %70 = math.exp %69 : vector<1x384xf32>
    %cst_33 = arith.constant 1.000000e+00 : f32
    %71 = vector.broadcast %cst_33 : f32 to vector<1x384xf32>
    %72 = arith.addf %71, %70 : vector<1x384xf32>
    %73 = arith.divf %71, %72 : vector<1x384xf32>
    %74 = vector.extract_strided_slice %73 {offsets = [0, 0], sizes = [1, 128], strides = [1, 1]} : vector<1x384xf32> to vector<1x128xf32>
    %75 = vector.extract_strided_slice %73 {offsets = [0, 128], sizes = [1, 128], strides = [1, 1]} : vector<1x384xf32> to vector<1x128xf32>
    %76 = vector.extract_strided_slice %73 {offsets = [0, 256], sizes = [1, 128], strides = [1, 1]} : vector<1x384xf32> to vector<1x128xf32>
    %77 = vector.extract_strided_slice %67 {offsets = [0, 384], sizes = [1, 128], strides = [1, 1]} : vector<1x512xf32> to vector<1x128xf32>
    %78 = math.tanh %77 : vector<1x128xf32>
    %79 = arith.mulf %75, %59 : vector<1x128xf32>
    %80 = arith.mulf %74, %78 : vector<1x128xf32>
    %81 = arith.addf %79, %80 : vector<1x128xf32>
    %82 = math.tanh %81 : vector<1x128xf32>
    %83 = arith.mulf %76, %82 : vector<1x128xf32>
    %c2_34 = arith.constant 2 : index
    %c0_35 = arith.constant 0 : index
    %84 = vector.load %arg9[%c2_34, %c0_35] : memref<8x128xf32, #tpu.memory_space<vmem>>, vector<1x128xf32>
    tpu.vector_store %arg9[%c2_34, %c0_35], %83 {strides = array<i32>} : memref<8x128xf32, #tpu.memory_space<vmem>>, vector<1x128xf32>,
    %c3 = arith.constant 3 : index
    %c0_36 = arith.constant 0 : index
    %85 = vector.load %arg8[%c3, %c0_36] : memref<8x512xf32, #tpu.memory_space<vmem>>, vector<1x512xf32>
    %86 = arith.truncf %83 : vector<1x128xf32> to vector<1x128xbf16>
    %c0_37 = arith.constant 0 : index
    %c0_38 = arith.constant 0 : index
    %87 = vector.load %arg3[%c0_37, %c0_38] : memref<128x512xbf16, #tpu.memory_space<vmem>>, vector<128x512xbf16>
    %cst_39 = arith.constant dense<0.000000e+00> : vector<1x512xf32>
    %88 = tpu.matmul %86, %87, %cst_39 {dimension_numbers = #tpu.dot_dimension_numbers<[1], [0], [0], [1], [0, 0, 1, 1], [], []>} : vector<1x128xbf16>, vector<128x512xbf16>, vector<1x512xf32> -> vector<1x512xf32>
    %89 = arith.addf %85, %88 : vector<1x512xf32>
    %90 = vector.extract_strided_slice %89 {offsets = [0, 0], sizes = [1, 384], strides = [1, 1]} : vector<1x512xf32> to vector<1x384xf32>
    %91 = arith.negf %90 : vector<1x384xf32>
    %92 = math.exp %91 : vector<1x384xf32>
    %cst_40 = arith.constant 1.000000e+00 : f32
    %93 = vector.broadcast %cst_40 : f32 to vector<1x384xf32>
    %94 = arith.addf %93, %92 : vector<1x384xf32>
    %95 = arith.divf %93, %94 : vector<1x384xf32>
    %96 = vector.extract_strided_slice %95 {offsets = [0, 0], sizes = [1, 128], strides = [1, 1]} : vector<1x384xf32> to vector<1x128xf32>
    %97 = vector.extract_strided_slice %95 {offsets = [0, 128], sizes = [1, 128], strides = [1, 1]} : vector<1x384xf32> to vector<1x128xf32>
    %98 = vector.extract_strided_slice %95 {offsets = [0, 256], sizes = [1, 128], strides = [1, 1]} : vector<1x384xf32> to vector<1x128xf32>
    %99 = vector.extract_strided_slice %89 {offsets = [0, 384], sizes = [1, 128], strides = [1, 1]} : vector<1x512xf32> to vector<1x128xf32>
    %100 = math.tanh %99 : vector<1x128xf32>
    %101 = arith.mulf %97, %81 : vector<1x128xf32>
    %102 = arith.mulf %96, %100 : vector<1x128xf32>
    %103 = arith.addf %101, %102 : vector<1x128xf32>
    %104 = math.tanh %103 : vector<1x128xf32>
    %105 = arith.mulf %98, %104 : vector<1x128xf32>
    %c3_41 = arith.constant 3 : index
    %c0_42 = arith.constant 0 : index
    %106 = vector.load %arg9[%c3_41, %c0_42] : memref<8x128xf32, #tpu.memory_space<vmem>>, vector<1x128xf32>
    tpu.vector_store %arg9[%c3_41, %c0_42], %105 {strides = array<i32>} : memref<8x128xf32, #tpu.memory_space<vmem>>, vector<1x128xf32>,
    %c4 = arith.constant 4 : index
    %c0_43 = arith.constant 0 : index
    %107 = vector.load %arg8[%c4, %c0_43] : memref<8x512xf32, #tpu.memory_space<vmem>>, vector<1x512xf32>
    %108 = arith.truncf %105 : vector<1x128xf32> to vector<1x128xbf16>
    %c0_44 = arith.constant 0 : index
    %c0_45 = arith.constant 0 : index
    %109 = vector.load %arg3[%c0_44, %c0_45] : memref<128x512xbf16, #tpu.memory_space<vmem>>, vector<128x512xbf16>
    %cst_46 = arith.constant dense<0.000000e+00> : vector<1x512xf32>
    %110 = tpu.matmul %108, %109, %cst_46 {dimension_numbers = #tpu.dot_dimension_numbers<[1], [0], [0], [1], [0, 0, 1, 1], [], []>} : vector<1x128xbf16>, vector<128x512xbf16>, vector<1x512xf32> -> vector<1x512xf32>
    %111 = arith.addf %107, %110 : vector<1x512xf32>
    %112 = vector.extract_strided_slice %111 {offsets = [0, 0], sizes = [1, 384], strides = [1, 1]} : vector<1x512xf32> to vector<1x384xf32>
    %113 = arith.negf %112 : vector<1x384xf32>
    %114 = math.exp %113 : vector<1x384xf32>
    %cst_47 = arith.constant 1.000000e+00 : f32
    %115 = vector.broadcast %cst_47 : f32 to vector<1x384xf32>
    %116 = arith.addf %115, %114 : vector<1x384xf32>
    %117 = arith.divf %115, %116 : vector<1x384xf32>
    %118 = vector.extract_strided_slice %117 {offsets = [0, 0], sizes = [1, 128], strides = [1, 1]} : vector<1x384xf32> to vector<1x128xf32>
    %119 = vector.extract_strided_slice %117 {offsets = [0, 128], sizes = [1, 128], strides = [1, 1]} : vector<1x384xf32> to vector<1x128xf32>
    %120 = vector.extract_strided_slice %117 {offsets = [0, 256], sizes = [1, 128], strides = [1, 1]} : vector<1x384xf32> to vector<1x128xf32>
    %121 = vector.extract_strided_slice %111 {offsets = [0, 384], sizes = [1, 128], strides = [1, 1]} : vector<1x512xf32> to vector<1x128xf32>
    %122 = math.tanh %121 : vector<1x128xf32>
    %123 = arith.mulf %119, %103 : vector<1x128xf32>
    %124 = arith.mulf %118, %122 : vector<1x128xf32>
    %125 = arith.addf %123, %124 : vector<1x128xf32>
    %126 = math.tanh %125 : vector<1x128xf32>
    %127 = arith.mulf %120, %126 : vector<1x128xf32>
    %c4_48 = arith.constant 4 : index
    %c0_49 = arith.constant 0 : index
    %128 = vector.load %arg9[%c4_48, %c0_49] : memref<8x128xf32, #tpu.memory_space<vmem>>, vector<1x128xf32>
    tpu.vector_store %arg9[%c4_48, %c0_49], %127 {strides = array<i32>} : memref<8x128xf32, #tpu.memory_space<vmem>>, vector<1x128xf32>,
    %c5 = arith.constant 5 : index
    %c0_50 = arith.constant 0 : index
    %129 = vector.load %arg8[%c5, %c0_50] : memref<8x512xf32, #tpu.memory_space<vmem>>, vector<1x512xf32>
    %130 = arith.truncf %127 : vector<1x128xf32> to vector<1x128xbf16>
    %c0_51 = arith.constant 0 : index
    %c0_52 = arith.constant 0 : index
    %131 = vector.load %arg3[%c0_51, %c0_52] : memref<128x512xbf16, #tpu.memory_space<vmem>>, vector<128x512xbf16>
    %cst_53 = arith.constant dense<0.000000e+00> : vector<1x512xf32>
    %132 = tpu.matmul %130, %131, %cst_53 {dimension_numbers = #tpu.dot_dimension_numbers<[1], [0], [0], [1], [0, 0, 1, 1], [], []>} : vector<1x128xbf16>, vector<128x512xbf16>, vector<1x512xf32> -> vector<1x512xf32>
    %133 = arith.addf %129, %132 : vector<1x512xf32>
    %134 = vector.extract_strided_slice %133 {offsets = [0, 0], sizes = [1, 384], strides = [1, 1]} : vector<1x512xf32> to vector<1x384xf32>
    %135 = arith.negf %134 : vector<1x384xf32>
    %136 = math.exp %135 : vector<1x384xf32>
    %cst_54 = arith.constant 1.000000e+00 : f32
    %137 = vector.broadcast %cst_54 : f32 to vector<1x384xf32>
    %138 = arith.addf %137, %136 : vector<1x384xf32>
    %139 = arith.divf %137, %138 : vector<1x384xf32>
    %140 = vector.extract_strided_slice %139 {offsets = [0, 0], sizes = [1, 128], strides = [1, 1]} : vector<1x384xf32> to vector<1x128xf32>
    %141 = vector.extract_strided_slice %139 {offsets = [0, 128], sizes = [1, 128], strides = [1, 1]} : vector<1x384xf32> to vector<1x128xf32>
    %142 = vector.extract_strided_slice %139 {offsets = [0, 256], sizes = [1, 128], strides = [1, 1]} : vector<1x384xf32> to vector<1x128xf32>
    %143 = vector.extract_strided_slice %133 {offsets = [0, 384], sizes = [1, 128], strides = [1, 1]} : vector<1x512xf32> to vector<1x128xf32>
    %144 = math.tanh %143 : vector<1x128xf32>
    %145 = arith.mulf %141, %125 : vector<1x128xf32>
    %146 = arith.mulf %140, %144 : vector<1x128xf32>
    %147 = arith.addf %145, %146 : vector<1x128xf32>
    %148 = math.tanh %147 : vector<1x128xf32>
    %149 = arith.mulf %142, %148 : vector<1x128xf32>
    %c5_55 = arith.constant 5 : index
    %c0_56 = arith.constant 0 : index
    %150 = vector.load %arg9[%c5_55, %c0_56] : memref<8x128xf32, #tpu.memory_space<vmem>>, vector<1x128xf32>
    tpu.vector_store %arg9[%c5_55, %c0_56], %149 {strides = array<i32>} : memref<8x128xf32, #tpu.memory_space<vmem>>, vector<1x128xf32>,
    %c6 = arith.constant 6 : index
    %c0_57 = arith.constant 0 : index
    %151 = vector.load %arg8[%c6, %c0_57] : memref<8x512xf32, #tpu.memory_space<vmem>>, vector<1x512xf32>
    %152 = arith.truncf %149 : vector<1x128xf32> to vector<1x128xbf16>
    %c0_58 = arith.constant 0 : index
    %c0_59 = arith.constant 0 : index
    %153 = vector.load %arg3[%c0_58, %c0_59] : memref<128x512xbf16, #tpu.memory_space<vmem>>, vector<128x512xbf16>
    %cst_60 = arith.constant dense<0.000000e+00> : vector<1x512xf32>
    %154 = tpu.matmul %152, %153, %cst_60 {dimension_numbers = #tpu.dot_dimension_numbers<[1], [0], [0], [1], [0, 0, 1, 1], [], []>} : vector<1x128xbf16>, vector<128x512xbf16>, vector<1x512xf32> -> vector<1x512xf32>
    %155 = arith.addf %151, %154 : vector<1x512xf32>
    %156 = vector.extract_strided_slice %155 {offsets = [0, 0], sizes = [1, 384], strides = [1, 1]} : vector<1x512xf32> to vector<1x384xf32>
    %157 = arith.negf %156 : vector<1x384xf32>
    %158 = math.exp %157 : vector<1x384xf32>
    %cst_61 = arith.constant 1.000000e+00 : f32
    %159 = vector.broadcast %cst_61 : f32 to vector<1x384xf32>
    %160 = arith.addf %159, %158 : vector<1x384xf32>
    %161 = arith.divf %159, %160 : vector<1x384xf32>
    %162 = vector.extract_strided_slice %161 {offsets = [0, 0], sizes = [1, 128], strides = [1, 1]} : vector<1x384xf32> to vector<1x128xf32>
    %163 = vector.extract_strided_slice %161 {offsets = [0, 128], sizes = [1, 128], strides = [1, 1]} : vector<1x384xf32> to vector<1x128xf32>
    %164 = vector.extract_strided_slice %161 {offsets = [0, 256], sizes = [1, 128], strides = [1, 1]} : vector<1x384xf32> to vector<1x128xf32>
    %165 = vector.extract_strided_slice %155 {offsets = [0, 384], sizes = [1, 128], strides = [1, 1]} : vector<1x512xf32> to vector<1x128xf32>
    %166 = math.tanh %165 : vector<1x128xf32>
    %167 = arith.mulf %163, %147 : vector<1x128xf32>
    %168 = arith.mulf %162, %166 : vector<1x128xf32>
    %169 = arith.addf %167, %168 : vector<1x128xf32>
    %170 = math.tanh %169 : vector<1x128xf32>
    %171 = arith.mulf %164, %170 : vector<1x128xf32>
    %c6_62 = arith.constant 6 : index
    %c0_63 = arith.constant 0 : index
    %172 = vector.load %arg9[%c6_62, %c0_63] : memref<8x128xf32, #tpu.memory_space<vmem>>, vector<1x128xf32>
    tpu.vector_store %arg9[%c6_62, %c0_63], %171 {strides = array<i32>} : memref<8x128xf32, #tpu.memory_space<vmem>>, vector<1x128xf32>,
    %c7 = arith.constant 7 : index
    %c0_64 = arith.constant 0 : index
    %173 = vector.load %arg8[%c7, %c0_64] : memref<8x512xf32, #tpu.memory_space<vmem>>, vector<1x512xf32>
    %174 = arith.truncf %171 : vector<1x128xf32> to vector<1x128xbf16>
    %c0_65 = arith.constant 0 : index
    %c0_66 = arith.constant 0 : index
    %175 = vector.load %arg3[%c0_65, %c0_66] : memref<128x512xbf16, #tpu.memory_space<vmem>>, vector<128x512xbf16>
    %cst_67 = arith.constant dense<0.000000e+00> : vector<1x512xf32>
    %176 = tpu.matmul %174, %175, %cst_67 {dimension_numbers = #tpu.dot_dimension_numbers<[1], [0], [0], [1], [0, 0, 1, 1], [], []>} : vector<1x128xbf16>, vector<128x512xbf16>, vector<1x512xf32> -> vector<1x512xf32>
    %177 = arith.addf %173, %176 : vector<1x512xf32>
    %178 = vector.extract_strided_slice %177 {offsets = [0, 0], sizes = [1, 384], strides = [1, 1]} : vector<1x512xf32> to vector<1x384xf32>
    %179 = arith.negf %178 : vector<1x384xf32>
    %180 = math.exp %179 : vector<1x384xf32>
    %cst_68 = arith.constant 1.000000e+00 : f32
    %181 = vector.broadcast %cst_68 : f32 to vector<1x384xf32>
    %182 = arith.addf %181, %180 : vector<1x384xf32>
    %183 = arith.divf %181, %182 : vector<1x384xf32>
    %184 = vector.extract_strided_slice %183 {offsets = [0, 0], sizes = [1, 128], strides = [1, 1]} : vector<1x384xf32> to vector<1x128xf32>
    %185 = vector.extract_strided_slice %183 {offsets = [0, 128], sizes = [1, 128], strides = [1, 1]} : vector<1x384xf32> to vector<1x128xf32>
    %186 = vector.extract_strided_slice %183 {offsets = [0, 256], sizes = [1, 128], strides = [1, 1]} : vector<1x384xf32> to vector<1x128xf32>
    %187 = vector.extract_strided_slice %177 {offsets = [0, 384], sizes = [1, 128], strides = [1, 1]} : vector<1x512xf32> to vector<1x128xf32>
    %188 = math.tanh %187 : vector<1x128xf32>
    %189 = arith.mulf %185, %169 : vector<1x128xf32>
    %190 = arith.mulf %184, %188 : vector<1x128xf32>
    %191 = arith.addf %189, %190 : vector<1x128xf32>
    %192 = math.tanh %191 : vector<1x128xf32>
    %193 = arith.mulf %186, %192 : vector<1x128xf32>
    %c7_69 = arith.constant 7 : index
    %c0_70 = arith.constant 0 : index
    %194 = vector.load %arg9[%c7_69, %c0_70] : memref<8x128xf32, #tpu.memory_space<vmem>>, vector<1x128xf32>
    tpu.vector_store %arg9[%c7_69, %c0_70], %193 {strides = array<i32>} : memref<8x128xf32, #tpu.memory_space<vmem>>, vector<1x128xf32>,
    %c0_71 = arith.constant 0 : index
    %c0_72 = arith.constant 0 : index
    %195 = vector.load %arg9[%c0_71, %c0_72] : memref<8x128xf32, #tpu.memory_space<vmem>>, vector<8x128xf32>
    %c0_73 = arith.constant 0 : index
    %c0_74 = arith.constant 0 : index
    %196 = vector.load %arg5[%c0_73, %c0_74] : memref<128x128xf32, #tpu.memory_space<vmem>>, vector<128x128xf32>
    %cst_75 = arith.constant dense<0.000000e+00> : vector<8x128xf32>
    %197 = tpu.matmul %195, %196, %cst_75 {dimension_numbers = #tpu.dot_dimension_numbers<[1], [0], [0], [1], [0, 0, 1, 1], [], []>} : vector<8x128xf32>, vector<128x128xf32>, vector<8x128xf32> -> vector<8x128xf32>
    %c0_76 = arith.constant 0 : index
    %c0_77 = arith.constant 0 : index
    %198 = vector.load %arg6[%c0_76, %c0_77] : memref<1x128xf32, #tpu.memory_space<vmem>>, vector<1x128xf32>
    %199 = vector.broadcast %198 : vector<1x128xf32> to vector<8x128xf32>
    %200 = arith.addf %197, %199 : vector<8x128xf32>
    %cst_78 = arith.constant dense<0xFF800000> : vector<8xf32>
    %201 = vector.multi_reduction <maximumf>, %200, %cst_78 [1] : vector<8x128xf32> to vector<8xf32>
    %202 = vector.shape_cast %201 : vector<8xf32> to vector<8x1xf32>
    %203 = vector.broadcast %202 : vector<8x1xf32> to vector<8x128xf32>
    %204 = arith.subf %200, %203 : vector<8x128xf32>
    %205 = math.exp %204 : vector<8x128xf32>
    %cst_79 = arith.constant dense<0.000000e+00> : vector<8xf32>
    %206 = vector.multi_reduction <add>, %205, %cst_79 [1] : vector<8x128xf32> to vector<8xf32>
    %207 = vector.shape_cast %206 : vector<8xf32> to vector<8x1xf32>
    %208 = math.log %207 : vector<8x1xf32>
    %209 = vector.broadcast %208 : vector<8x1xf32> to vector<8x128xf32>
    %210 = arith.subf %204, %209 : vector<8x128xf32>
    %c0_80 = arith.constant 0 : index
    %c0_81 = arith.constant 0 : index
    %211 = vector.load %arg7[%c0_80, %c0_81] : memref<8x128xf32, #tpu.memory_space<vmem>>, vector<8x128xf32>
    tpu.vector_store %arg7[%c0_80, %c0_81], %210 {strides = array<i32>} : memref<8x128xf32, #tpu.memory_space<vmem>>, vector<8x128xf32>,
    return
  }
}

</mosaic_0001>

<llo_original>
// kernel: tpu_custom_call.1
$region0: #{tpu_custom_call.1}
  #allocation0 [shape = 'u32[]', space=smem, size = 0x4, offset = 0x4, fixed_abs, tag = 'smem constant byte address 0x4 - core index']
  #allocation1 [shape = 'u32[144,128]{1,0:T(1,128)}', space=vmem, size = 0x12000, scoped, tag = 'internal scratch']
  #allocation2 [shape = 'f32[8,512]{1,0:T(8,128)}', space=vmem, size = 0x4000, scoped, tag = 'scratch operand']
  #allocation3 [shape = 'f32[8,128]{1,0:T(8,128)}', space=vmem, size = 0x1000, scoped, tag = 'scratch operand']
  %s0 = inlined_call_operand.vmem [shape: s32[8,1], index: 0, kind: input, shape index: {}]
  %s1 = inlined_call_operand.vmem [shape: bf16[16,32], index: 1, kind: input, shape index: {}]
  %s2 = inlined_call_operand.hbm [shape: bf16[32,512], index: 2, kind: input, shape index: {}]
  %s3 = inlined_call_operand.hbm [shape: bf16[128,512], index: 3, kind: input, shape index: {}]
  %s4 = inlined_call_operand.vmem [shape: f32[1,512], index: 4, kind: input, shape index: {}]
  %s5 = inlined_call_operand.hbm [shape: f32[128,128], index: 5, kind: input, shape index: {}]
  %s6 = inlined_call_operand.vmem [shape: f32[1,128], index: 6, kind: input, shape index: {}]
  %s7 = inlined_call_operand.hbm [shape: f32[8,128], index: 7, kind: output, shape index: {}]
  %s8 = sld [smem:[#allocation0]]
  $region50: #{tpu_custom_call.1} parent=0
    _
  %s10 = ssub.s32 1, %s8
  %s11 = scalar_select 0, %s10, %s8
  $region1: #{tpu_custom_call.1} parent=0
    #allocation4 [shape = 'u8[32768]{0}', space=vmem, size = 0x8000, scoped, tag = 'input window, operand 2, single buffered']
    #allocation5 [shape = 's32[1]{0}', space=sflag, size = 0x4, scoped, tag = 'scoped memory for tpu_custom_call.1']
    #allocation6 [shape = 's32[1]{0}', space=sflag, size = 0x4, scoped, tag = 'scoped memory for tpu_custom_call.1']
    #allocation7 [shape = 'u8[131072]{0}', space=vmem, size = 0x20000, scoped, tag = 'input window, operand 3, single buffered']
    #allocation8 [shape = 's32[1]{0}', space=sflag, size = 0x4, scoped, tag = 'scoped memory for tpu_custom_call.1']
    #allocation9 [shape = 'u8[65536]{0}', space=vmem, size = 0x10000, scoped, tag = 'input window, operand 5, single buffered']
    #allocation10 [shape = 'u8[4096]{0}', space=vmem, size = 0x1000, scoped, tag = 'output window, operand 0, single buffered']
    %12 = vsyncpa [#allocation5], 0
    %13 = vsyncpa [#allocation8], 0
    %14 = vsyncpa [#allocation6], 0
    // Predicated region
    $region2: #{tpu_custom_call.1} parent=1 // pred_check
      _
    $region3: #{tpu_custom_call.1} parent=1 // pred_check_branch
      %16 = sbr.rel (0) target = $region5
    $region4: #{tpu_custom_call.1} parent=1 // pred_region
      _
    $region5: #{tpu_custom_call.1} parent=1 // pred_fallthru
      _
    // Predicated region
    $region6: #{tpu_custom_call.1} parent=1 // pred_check
      _
    $region7: #{tpu_custom_call.1} parent=1 // pred_check_branch
      %18 = sbr.rel (0) target = $region9
    $region8: #{tpu_custom_call.1} parent=1 // pred_region
      _
    $region9: #{tpu_custom_call.1} parent=1 // pred_fallthru
      _
    // Predicated region
    $region10: #{tpu_custom_call.1} parent=1 // pred_check
      _
    $region11: #{tpu_custom_call.1} parent=1 // pred_check_branch
      %20 = sbr.rel (0) target = $region13
    $region12: #{tpu_custom_call.1} parent=1 // pred_region
      %s22 = ssub.s32 1024, 1024
      %23 = vsyncadd [#allocation5], %s22
      %s24 = sshll.u32 [#allocation4], 4
      %s25 = int_to_ptr.vmem [resolvable:$true] %s24
      %30 = dma.hbm_to_vmem [thread:$0]  %s2, 1024, %s25, [#allocation5], 256, 256, 16
    $region13: #{tpu_custom_call.1} parent=1 // pred_fallthru
      _
    // Predicated region
    $region14: #{tpu_custom_call.1} parent=1 // pred_check
      _
    $region15: #{tpu_custom_call.1} parent=1 // pred_check_branch
      %32 = sbr.rel (0) target = $region17
    $region16: #{tpu_custom_call.1} parent=1 // pred_region
      %s34 = ssub.s32 4096, 4096
      %35 = vsyncadd [#allocation8], %s34
      %s36 = sshll.u32 [#allocation7], 4
      %s37 = int_to_ptr.vmem [resolvable:$true] %s36
      %42 = dma.hbm_to_vmem [thread:$0]  %s3, 4096, %s37, [#allocation8], 256, 256, 16
    $region17: #{tpu_custom_call.1} parent=1 // pred_fallthru
      _
    // Predicated region
    $region18: #{tpu_custom_call.1} parent=1 // pred_check
      _
    $region19: #{tpu_custom_call.1} parent=1 // pred_check_branch
      %44 = sbr.rel (0) target = $region21
    $region20: #{tpu_custom_call.1} parent=1 // pred_region
      _
    $region21: #{tpu_custom_call.1} parent=1 // pred_fallthru
      _
    // Predicated region
    $region22: #{tpu_custom_call.1} parent=1 // pred_check
      _
    $region23: #{tpu_custom_call.1} parent=1 // pred_check_branch
      %46 = sbr.rel (0) target = $region25
    $region24: #{tpu_custom_call.1} parent=1 // pred_region
      %s48 = ssub.s32 2048, 2048
      %49 = vsyncadd [#allocation8], %s48
      %s50 = sshll.u32 [#allocation9], 4
      %s51 = int_to_ptr.vmem [resolvable:$true] %s50
      %56 = dma.hbm_to_vmem [thread:$0]  %s5, 2048, %s51, [#allocation8], 128, 128, 8
    $region25: #{tpu_custom_call.1} parent=1 // pred_fallthru
      _
    // Predicated region
    $region26: #{tpu_custom_call.1} parent=1 // pred_check
      _
    $region27: #{tpu_custom_call.1} parent=1 // pred_check_branch
      %58 = sbr.rel (0) target = $region29
    $region28: #{tpu_custom_call.1} parent=1 // pred_region
      _
    $region29: #{tpu_custom_call.1} parent=1 // pred_fallthru
      _
    // Predicated region
    $region30: #{tpu_custom_call.1} parent=1 // pred_check
      _
    $region31: #{tpu_custom_call.1} parent=1 // pred_check_branch
      %60 = sbr.rel (0) target = $region33
    $region32: #{tpu_custom_call.1} parent=1 // pred_region
      %61 = dma.done [#allocation5], 1024
    $region33: #{tpu_custom_call.1} parent=1 // pred_fallthru
      _
    // Predicated region
    $region34: #{tpu_custom_call.1} parent=1 // pred_check
      _
    $region35: #{tpu_custom_call.1} parent=1 // pred_check_branch
      %63 = sbr.rel (0) target = $region37
    $region36: #{tpu_custom_call.1} parent=1 // pred_region
      %64 = dma.done [#allocation8], 4096
    $region37: #{tpu_custom_call.1} parent=1 // pred_fallthru
      _
    // Predicated region
    $region38: #{tpu_custom_call.1} parent=1 // pred_check
      _
    $region39: #{tpu_custom_call.1} parent=1 // pred_check_branch
      %66 = sbr.rel (0) target = $region41
    $region40: #{tpu_custom_call.1} parent=1 // pred_region
      %67 = dma.done [#allocation8], 2048
    $region41: #{tpu_custom_call.1} parent=1 // pred_fallthru
      _
    %v69 = vld [vmem:[%s0] sm:$0xff]
    %v70 = vlaneseq
    %v71 = vand.u32 %v70, 127
    %72 = vset.pattern.permute.xlu0 0
    %73 = vperm.xlu0 %72, %v69
    %v74 = vpop.permute.xlu0 %73
    %vm75 = vcmp.eq.s32.totalorder %v74, %v71
    %v76 = vsel %vm75, 1.0, 0.0
    %v77 = vpack.c.bf16 %v76, %v76
    %v78 = vld [vmem:[%s1] sm:$0xf]
    %v79 = vld [vmem:[%s1 + $0x4] sm:$0xf]
    %v82 = vunpack.c.l.b16 %v78
    %v83 = vunpack.c.l.b16 %v79
    %v84 = vpack.c.b16 %v83, %v82
    %vm86 = vcmask 130048
    %v88 = vsel %vm86, %v77, 0
    %90 = vmatprep.subr.bf16.mxu0 0
    %91 = vmatpush1.bf16.msra.mxu0 0
    %92 = vmatprep.subr.bf16.mxu0 0
    %93 = vmatpush1.bf16.msra.mxu0 0
    %94 = vmatprep.subr.bf16.mxu0 0
    %95 = vmatpush1.bf16.msra.mxu0 0
    %96 = vmatprep.subr.bf16.mxu0 0
    %97 = vmatpush1.bf16.msra.mxu0 0
    %98 = vmatprep.subr.bf16.mxu0 0
    %99 = vmatpush1.bf16.msra.mxu0 0
    %100 = vmatprep.subr.bf16.mxu0 0
    %101 = vmatpush1.bf16.msra.mxu0 0
    %102 = vmatprep.subr.bf16.mxu0 0
    %103 = vmatpush1.bf16.msra.mxu0 0
    %104 = vmatprep.subr.bf16.mxu0 0
    %105 = vmatpush1.bf16.msra.mxu0 %v84
    %106 = vmatprep.subr.bf16.mxu0 0
    %107 = vmatpush2.bf16.msra.mxu0 0
    %108 = vmatprep.subr.bf16.mxu0 0
    %109 = vmatpush2.bf16.msra.mxu0 0
    %110 = vmatprep.subr.bf16.mxu0 0
    %111 = vmatpush2.bf16.msra.mxu0 0
    %112 = vmatprep.subr.bf16.mxu0 0
    %113 = vmatpush2.bf16.msra.mxu0 0
    %114 = vmatprep.subr.bf16.mxu0 0
    %115 = vmatpush2.bf16.msra.mxu0 0
    %116 = vmatprep.subr.bf16.mxu0 0
    %117 = vmatpush2.bf16.msra.mxu0 0
    %118 = vmatprep.subr.bf16.mxu0 0
    %119 = vmatpush2.bf16.msra.mxu0 0
    %120 = vmatprep.subr.bf16.mxu0 0
    %121 = vmatpush2.bf16.msra.mxu0 0
    %122 = vmatprep.mubr.bf16.mxu0 0
    %123 = vmatmul.mubr.bf16.gmra.mxu0 %v88
    %v124 = vpop.f32.mrf.mxu0
    %v125 = vadd.f32 0.0, %v124
    %v126 = vpop.f32.mrf.mxu0
    %v127 = vpop.f32.mrf.mxu0
    %v128 = vpop.f32.mrf.mxu0
    %129 = vdwg.mxu0
    %v130 = vpack.c.bf16 %v125, %v125
    %v131 = vld [vmem:[#allocation4] sm:$0xff]
    %v132 = vld [vmem:[#allocation4 + $0x8] sm:$0xff]
    %v133 = vld [vmem:[#allocation4 + $0x10] sm:$0xff]
    %v134 = vld [vmem:[#allocation4 + $0x18] sm:$0xff]
    %v135 = vld [vmem:[#allocation4 + $0x20] sm:$0xff]
    %v136 = vld [vmem:[#allocation4 + $0x28] sm:$0xff]
    %v137 = vld [vmem:[#allocation4 + $0x30] sm:$0xff]
    %v138 = vld [vmem:[#allocation4 + $0x38] sm:$0xff]
    %v139 = vld [vmem:[%s4] sm:$0xf]
    %v141 = vlaneseq
    %v142 = vshrl.u32 %v141, 7
    %v143 = vsub.s32 0, %v142
    %v144 = vrot.slane %v139, %v143
    %v145 = vlaneseq
    %v146 = vshrl.u32 %v145, 7
    %v147 = vsub.s32 1, %v146
    %v148 = vrot.slane %v139, %v147
    %v149 = vlaneseq
    %v150 = vshrl.u32 %v149, 7
    %v151 = vsub.s32 2, %v150
    %v152 = vrot.slane %v139, %v151
    %v153 = vlaneseq
    %v154 = vshrl.u32 %v153, 7
    %v155 = vsub.s32 3, %v154
    %v156 = vrot.slane %v139, %v155
    %v169 = vunpack.c.l.b16 %v131
    %v170 = vunpack.c.h.b16 %v131
    %v171 = vunpack.c.l.b16 %v132
    %v172 = vunpack.c.h.b16 %v132
    %v173 = vunpack.c.l.b16 %v133
    %v174 = vunpack.c.h.b16 %v133
    %v175 = vunpack.c.l.b16 %v134
    %v176 = vunpack.c.h.b16 %v134
    %v177 = vunpack.c.l.b16 %v135
    %v178 = vunpack.c.h.b16 %v135
    %v179 = vunpack.c.l.b16 %v136
    %v180 = vunpack.c.h.b16 %v136
    %v181 = vunpack.c.l.b16 %v137
    %v182 = vunpack.c.h.b16 %v137
    %v183 = vunpack.c.l.b16 %v138
    %v184 = vunpack.c.h.b16 %v138
    %v185 = vpack.c.b16 %v173, %v169
    %v186 = vpack.c.b16 %v174, %v170
    %v187 = vpack.c.b16 %v175, %v171
    %v188 = vpack.c.b16 %v176, %v172
    %v189 = vpack.c.b16 %v181, %v177
    %v190 = vpack.c.b16 %v182, %v178
    %v191 = vpack.c.b16 %v183, %v179
    %v192 = vpack.c.b16 %v184, %v180
    %vm201 = vcmask 261120
    %v203 = vsel %vm201, %v130, 0
    %205 = vmatprep.subr.bf16.mxu0 0
    %206 = vmatpush1.bf16.msra.mxu0 0
    %207 = vmatprep.subr.bf16.mxu0 0
    %208 = vmatpush1.bf16.msra.mxu0 0
    %209 = vmatprep.subr.bf16.mxu0 0
    %210 = vmatpush1.bf16.msra.mxu0 0
    %211 = vmatprep.subr.bf16.mxu0 0
    %212 = vmatpush1.bf16.msra.mxu0 0
    %213 = vmatprep.subr.bf16.mxu0 0
    %214 = vmatpush1.bf16.msra.mxu0 0
    %215 = vmatprep.subr.bf16.mxu0 0
    %216 = vmatpush1.bf16.msra.mxu0 0
    %217 = vmatprep.subr.bf16.mxu0 %v190
    %218 = vmatpush1.bf16.msra.mxu0 %v189
    %219 = vmatprep.subr.bf16.mxu0 %v186
    %220 = vmatpush1.bf16.msra.mxu0 %v185
    %221 = vmatprep.subr.bf16.mxu0 0
    %222 = vmatpush2.bf16.msra.mxu0 0
    %223 = vmatprep.subr.bf16.mxu0 0
    %224 = vmatpush2.bf16.msra.mxu0 0
    %225 = vmatprep.subr.bf16.mxu0 0
    %226 = vmatpush2.bf16.msra.mxu0 0
    %227 = vmatprep.subr.bf16.mxu0 0
    %228 = vmatpush2.bf16.msra.mxu0 0
    %229 = vmatprep.subr.bf16.mxu0 0
    %230 = vmatpush2.bf16.msra.mxu0 0
    %231 = vmatprep.subr.bf16.mxu0 0
    %232 = vmatpush2.bf16.msra.mxu0 0
    %233 = vmatprep.subr.bf16.mxu0 0
    %234 = vmatpush2.bf16.msra.mxu0 0
    %235 = vmatprep.subr.bf16.mxu0 0
    %236 = vmatpush2.bf16.msra.mxu0 0
    %237 = vmatprep.mubr.bf16.mxu0 0
    %238 = vmatmul.mubr.bf16.gmra.mxu0 %v203
    %v239 = vpop.f32.mrf.mxu0
    %v240 = vadd.f32 %v144, %v239
    %v241 = vpop.f32.mrf.mxu0
    %v242 = vadd.f32 %v148, %v241
    %v243 = vpop.f32.mrf.mxu0
    %v244 = vpop.f32.mrf.mxu0
    %245 = vdwg.mxu0
    %246 = vmatprep.subr.bf16.mxu0 0
    %247 = vmatpush1.bf16.msra.mxu0 0
    %248 = vmatprep.subr.bf16.mxu0 0
    %249 = vmatpush1.bf16.msra.mxu0 0
    %250 = vmatprep.subr.bf16.mxu0 0
    %251 = vmatpush1.bf16.msra.mxu0 0
    %252 = vmatprep.subr.bf16.mxu0 0
    %253 = vmatpush1.bf16.msra.mxu0 0
    %254 = vmatprep.subr.bf16.mxu0 0
    %255 = vmatpush1.bf16.msra.mxu0 0
    %256 = vmatprep.subr.bf16.mxu0 0
    %257 = vmatpush1.bf16.msra.mxu0 0
    %258 = vmatprep.subr.bf16.mxu0 %v192
    %259 = vmatpush1.bf16.msra.mxu0 %v191
    %260 = vmatprep.subr.bf16.mxu0 %v188
    %261 = vmatpush1.bf16.msra.mxu0 %v187
    %262 = vmatprep.subr.bf16.mxu0 0
    %263 = vmatpush2.bf16.msra.mxu0 0
    %264 = vmatprep.subr.bf16.mxu0 0
    %265 = vmatpush2.bf16.msra.mxu0 0
    %266 = vmatprep.subr.bf16.mxu0 0
    %267 = vmatpush2.bf16.msra.mxu0 0
    %268 = vmatprep.subr.bf16.mxu0 0
    %269 = vmatpush2.bf16.msra.mxu0 0
    %270 = vmatprep.subr.bf16.mxu0 0
    %271 = vmatpush2.bf16.msra.mxu0 0
    %272 = vmatprep.subr.bf16.mxu0 0
    %273 = vmatpush2.bf16.msra.mxu0 0
    %274 = vmatprep.subr.bf16.mxu0 0
    %275 = vmatpush2.bf16.msra.mxu0 0
    %276 = vmatprep.subr.bf16.mxu0 0
    %277 = vmatpush2.bf16.msra.mxu0 0
    %278 = vmatprep.mubr.bf16.mxu0 0
    %279 = vmatmul.mubr.bf16.gmra.mxu0 %v203
    %v280 = vpop.f32.mrf.mxu0
    %v281 = vadd.f32 %v152, %v280
    %v282 = vpop.f32.mrf.mxu0
    %v283 = vadd.f32 %v156, %v282
    %v284 = vpop.f32.mrf.mxu0
    %v285 = vpop.f32.mrf.mxu0
    %286 = vdwg.mxu0
    %287 = vst [vmem:[#allocation2] sm:$0xff] %v240
    %288 = vst [vmem:[#allocation2 + $0x8] sm:$0xff] %v242
    %289 = vst [vmem:[#allocation2 + $0x10] sm:$0xff] %v281
    %290 = vst [vmem:[#allocation2 + $0x18] sm:$0xff] %v283
    %v291 = vld [vmem:[#allocation2] ss:$8 sm:$0xf]
    %v292 = vld [vmem:[#allocation7] sm:$0xff]
    %v293 = vld [vmem:[#allocation7 + $0x8] sm:$0xff]
    %v294 = vld [vmem:[#allocation7 + $0x10] sm:$0xff]
    %v295 = vld [vmem:[#allocation7 + $0x18] sm:$0xff]
    %v296 = vld [vmem:[#allocation7 + $0x20] sm:$0xff]
    %v297 = vld [vmem:[#allocation7 + $0x28] sm:$0xff]
    %v298 = vld [vmem:[#allocation7 + $0x30] sm:$0xff]
    %v299 = vld [vmem:[#allocation7 + $0x38] sm:$0xff]
    %v300 = vld [vmem:[#allocation7 + $0x40] sm:$0xff]
    %v301 = vld [vmem:[#allocation7 + $0x48] sm:$0xff]
    %v302 = vld [vmem:[#allocation7 + $0x50] sm:$0xff]
    %v303 = vld [vmem:[#allocation7 + $0x58] sm:$0xff]
    %v304 = vld [vmem:[#allocation7 + $0x60] sm:$0xff]
    %v305 = vld [vmem:[#allocation7 + $0x68] sm:$0xff]
    %v306 = vld [vmem:[#allocation7 + $0x70] sm:$0xff]
    %v307 = vld [vmem:[#allocation7 + $0x78] sm:$0xff]
    %v308 = vld [vmem:[#allocation7 + $0x80] sm:$0xff]
    %v309 = vld [vmem:[#allocation7 + $0x88] sm:$0xff]
    %v310 = vld [vmem:[#allocation7 + $0x90] sm:$0xff]
    %v311 = vld [vmem:[#allocation7 + $0x98] sm:$0xff]
    %v312 = vld [vmem:[#allocation7 + $0xa0] sm:$0xff]
    %v313 = vld [vmem:[#allocation7 + $0xa8] sm:$0xff]
    %v314 = vld [vmem:[#allocation7 + $0xb0] sm:$0xff]
    %v315 = vld [vmem:[#allocation7 + $0xb8] sm:$0xff]
    %v316 = vld [vmem:[#allocation7 + $0xc0] sm:$0xff]
    %v317 = vld [vmem:[#allocation7 + $0xc8] sm:$0xff]
    %v318 = vld [vmem:[#allocation7 + $0xd0] sm:$0xff]
    %v319 = vld [vmem:[#allocation7 + $0xd8] sm:$0xff]
    %v320 = vld [vmem:[#allocation7 + $0xe0] sm:$0xff]
    %v321 = vld [vmem:[#allocation7 + $0xe8] sm:$0xff]
    %v322 = vld [vmem:[#allocation7 + $0xf0] sm:$0xff]
    %v323 = vld [vmem:[#allocation7 + $0xf8] sm:$0xff]
    %v356 = vunpack.c.l.b16 %v292
    %v357 = vunpack.c.h.b16 %v292
    %v358 = vunpack.c.l.b16 %v293
    %v359 = vunpack.c.h.b16 %v293
    %v360 = vunpack.c.l.b16 %v294
    %v361 = vunpack.c.h.b16 %v294
    %v362 = vunpack.c.l.b16 %v295
    %v363 = vunpack.c.h.b16 %v295
    %v364 = vunpack.c.l.b16 %v296
    %v365 = vunpack.c.h.b16 %v296
    %v366 = vunpack.c.l.b16 %v297
    %v367 = vunpack.c.h.b16 %v297
    %v368 = vunpack.c.l.b16 %v298
    %v369 = vunpack.c.h.b16 %v298
    %v370 = vunpack.c.l.b16 %v299
    %v371 = vunpack.c.h.b16 %v299
    %v372 = vunpack.c.l.b16 %v300
    %v373 = vunpack.c.h.b16 %v300
    %v374 = vunpack.c.l.b16 %v301
    %v375 = vunpack.c.h.b16 %v301
    %v376 = vunpack.c.l.b16 %v302
    %v377 = vunpack.c.h.b16 %v302
    %v378 = vunpack.c.l.b16 %v303
    %v379 = vunpack.c.h.b16 %v303
    %v380 = vunpack.c.l.b16 %v304
    %v381 = vunpack.c.h.b16 %v304
    %v382 = vunpack.c.l.b16 %v305
    %v383 = vunpack.c.h.b16 %v305
    %v384 = vunpack.c.l.b16 %v306
    %v385 = vunpack.c.h.b16 %v306
    %v386 = vunpack.c.l.b16 %v307
    %v387 = vunpack.c.h.b16 %v307
    %v388 = vunpack.c.l.b16 %v308
    %v389 = vunpack.c.h.b16 %v308
    %v390 = vunpack.c.l.b16 %v309
    %v391 = vunpack.c.h.b16 %v309
    %v392 = vunpack.c.l.b16 %v310
    %v393 = vunpack.c.h.b16 %v310
    %v394 = vunpack.c.l.b16 %v311
    %v395 = vunpack.c.h.b16 %v311
    %v396 = vunpack.c.l.b16 %v312
    %v397 = vunpack.c.h.b16 %v312
    %v398 = vunpack.c.l.b16 %v313
    %v399 = vunpack.c.h.b16 %v313
    %v400 = vunpack.c.l.b16 %v314
    %v401 = vunpack.c.h.b16 %v314
    %v402 = vunpack.c.l.b16 %v315
    %v403 = vunpack.c.h.b16 %v315
    %v404 = vunpack.c.l.b16 %v316
    %v405 = vunpack.c.h.b16 %v316
    %v406 = vunpack.c.l.b16 %v317
    %v407 = vunpack.c.h.b16 %v317
    %v408 = vunpack.c.l.b16 %v318
    %v409 = vunpack.c.h.b16 %v318
    %v410 = vunpack.c.l.b16 %v319
    %v411 = vunpack.c.h.b16 %v319
    %v412 = vunpack.c.l.b16 %v320
    %v413 = vunpack.c.h.b16 %v320
    %v414 = vunpack.c.l.b16 %v321
    %v415 = vunpack.c.h.b16 %v321
    %v416 = vunpack.c.l.b16 %v322
    %v417 = vunpack.c.h.b16 %v322
    %v418 = vunpack.c.l.b16 %v323
    %v419 = vunpack.c.h.b16 %v323
    %v420 = vpack.c.b16 %v360, %v356
    %v421 = vpack.c.b16 %v361, %v357
    %v422 = vpack.c.b16 %v362, %v358
    %v423 = vpack.c.b16 %v363, %v359
    %v424 = vpack.c.b16 %v368, %v364
    %v425 = vpack.c.b16 %v369, %v365
    %v426 = vpack.c.b16 %v370, %v366
    %v427 = vpack.c.b16 %v371, %v367
    %v428 = vpack.c.b16 %v376, %v372
    %v429 = vpack.c.b16 %v377, %v373
    %v430 = vpack.c.b16 %v378, %v374
    %v431 = vpack.c.b16 %v379, %v375
    %v432 = vpack.c.b16 %v384, %v380
    %v433 = vpack.c.b16 %v385, %v381
    %v434 = vpack.c.b16 %v386, %v382
    %v435 = vpack.c.b16 %v387, %v383
    %v436 = vpack.c.b16 %v392, %v388
    %v437 = vpack.c.b16 %v393, %v389
    %v438 = vpack.c.b16 %v394, %v390
    %v439 = vpack.c.b16 %v395, %v391
    %v440 = vpack.c.b16 %v400, %v396
    %v441 = vpack.c.b16 %v401, %v397
    %v442 = vpack.c.b16 %v402, %v398
    %v443 = vpack.c.b16 %v403, %v399
    %v444 = vpack.c.b16 %v408, %v404
    %v445 = vpack.c.b16 %v409, %v405
    %v446 = vpack.c.b16 %v410, %v406
    %v447 = vpack.c.b16 %v411, %v407
    %v448 = vpack.c.b16 %v416, %v412
    %v449 = vpack.c.b16 %v417, %v413
    %v450 = vpack.c.b16 %v418, %v414
    %v451 = vpack.c.b16 %v419, %v415
    %484 = vmatprep.subr.bf16.mxu0 %v449
    %485 = vmatpush1.bf16.msra.mxu0 %v448
    %486 = vmatprep.subr.bf16.mxu0 %v445
    %487 = vmatpush1.bf16.msra.mxu0 %v444
    %488 = vmatprep.subr.bf16.mxu0 %v441
    %489 = vmatpush1.bf16.msra.mxu0 %v440
    %490 = vmatprep.subr.bf16.mxu0 %v437
    %491 = vmatpush1.bf16.msra.mxu0 %v436
    %492 = vmatprep.subr.bf16.mxu0 %v433
    %493 = vmatpush1.bf16.msra.mxu0 %v432
    %494 = vmatprep.subr.bf16.mxu0 %v429
    %495 = vmatpush1.bf16.msra.mxu0 %v428
    %496 = vmatprep.subr.bf16.mxu0 %v425
    %497 = vmatpush1.bf16.msra.mxu0 %v424
    %498 = vmatprep.subr.bf16.mxu0 %v421
    %499 = vmatpush1.bf16.msra.mxu0 %v420
    %500 = vmatprep.subr.bf16.mxu0 0
    %501 = vmatpush2.bf16.msra.mxu0 0
    %502 = vmatprep.subr.bf16.mxu0 0
    %503 = vmatpush2.bf16.msra.mxu0 0
    %504 = vmatprep.subr.bf16.mxu0 0
    %505 = vmatpush2.bf16.msra.mxu0 0
    %506 = vmatprep.subr.bf16.mxu0 0
    %507 = vmatpush2.bf16.msra.mxu0 0
    %508 = vmatprep.subr.bf16.mxu0 0
    %509 = vmatpush2.bf16.msra.mxu0 0
    %510 = vmatprep.subr.bf16.mxu0 0
    %511 = vmatpush2.bf16.msra.mxu0 0
    %512 = vmatprep.subr.bf16.mxu0 0
    %513 = vmatpush2.bf16.msra.mxu0 0
    %514 = vmatprep.subr.bf16.mxu0 0
    %515 = vmatpush2.bf16.msra.mxu0 0
    %516 = vmatprep.mubr.bf16.mxu0 0
    %517 = vmatmul.mubr.bf16.gmra.mxu0 0
    %v518 = vpop.f32.mrf.mxu0
    %v519 = vadd.f32 0.0, %v518
    %v520 = vpop.f32.mrf.mxu0
    %v521 = vadd.f32 0.0, %v520
    %v522 = vpop.f32.mrf.mxu0
    %v523 = vpop.f32.mrf.mxu0
    %524 = vdwg.mxu0
    %525 = vmatprep.subr.bf16.mxu0 %v451
    %526 = vmatpush1.bf16.msra.mxu0 %v450
    %527 = vmatprep.subr.bf16.mxu0 %v447
    %528 = vmatpush1.bf16.msra.mxu0 %v446
    %529 = vmatprep.subr.bf16.mxu0 %v443
    %530 = vmatpush1.bf16.msra.mxu0 %v442
    %531 = vmatprep.subr.bf16.mxu0 %v439
    %532 = vmatpush1.bf16.msra.mxu0 %v438
    %533 = vmatprep.subr.bf16.mxu0 %v435
    %534 = vmatpush1.bf16.msra.mxu0 %v434
    %535 = vmatprep.subr.bf16.mxu0 %v431
    %536 = vmatpush1.bf16.msra.mxu0 %v430
    %537 = vmatprep.subr.bf16.mxu0 %v427
    %538 = vmatpush1.bf16.msra.mxu0 %v426
    %539 = vmatprep.subr.bf16.mxu0 %v423
    %540 = vmatpush1.bf16.msra.mxu0 %v422
    %541 = vmatprep.subr.bf16.mxu0 0
    %542 = vmatpush2.bf16.msra.mxu0 0
    %543 = vmatprep.subr.bf16.mxu0 0
    %544 = vmatpush2.bf16.msra.mxu0 0
    %545 = vmatprep.subr.bf16.mxu0 0
    %546 = vmatpush2.bf16.msra.mxu0 0
    %547 = vmatprep.subr.bf16.mxu0 0
    %548 = vmatpush2.bf16.msra.mxu0 0
    %549 = vmatprep.subr.bf16.mxu0 0
    %550 = vmatpush2.bf16.msra.mxu0 0
    %551 = vmatprep.subr.bf16.mxu0 0
    %552 = vmatpush2.bf16.msra.mxu0 0
    %553 = vmatprep.subr.bf16.mxu0 0
    %554 = vmatpush2.bf16.msra.mxu0 0
    %555 = vmatprep.subr.bf16.mxu0 0
    %556 = vmatpush2.bf16.msra.mxu0 0
    %557 = vmatprep.mubr.bf16.mxu0 0
    %558 = vmatmul.mubr.bf16.gmra.mxu0 0
    %v559 = vpop.f32.mrf.mxu0
    %v560 = vadd.f32 0.0, %v559
    %v561 = vpop.f32.mrf.mxu0
    %v562 = vadd.f32 0.0, %v561
    %v563 = vpop.f32.mrf.mxu0
    %v564 = vpop.f32.mrf.mxu0
    %565 = vdwg.mxu0
    %v570 = vcombine.low %v519, %v521
    %v571 = vcombine.low %v560, %v562
    %v573 = vunpack.c.l.s4 1966171168
    %v574 = vunpack.c.0.s8 %v573
    %v575 = vlaneseq
    %v576 = vshrl.u32 %v575, 7
    %v577 = vsub.s32 %v574, %v576
    %v578 = vrot.slane %v570, %v577
    %v580 = vunpack.c.l.s4 1966171168
    %v581 = vunpack.c.0.s8 %v580
    %v582 = vlaneseq
    %v583 = vshrl.u32 %v582, 7
    %v584 = vsub.s32 %v581, %v583
    %v585 = vrot.slane %v571, %v584
    %v586 = vcombine.low %v578, %v585
    %v588 = vunpack.c.l.s4 1966171168
    %v589 = vunpack.c.0.s8 %v588
    %v590 = vlaneseq
    %v591 = vshrl.u32 %v590, 7
    %v592 = vsub.s32 %v589, %v591
    %v593 = vrot.slane %v586, %v592
    %v595 = vadd.f32 %v291, %v593
    %v596 = vxor.u32 %v595, 2147483648
    %v597 = vmul.f32 %v596, 1.442695
    %v598 = vpow.pop %v597
    %v599 = vadd.f32 %v598, 1.0
    %v600 = vrcp.pop %v599
    %v601 = vmul.f32 1.0, %v600
    %v603 = vrot.slane %v595, 3
    %v605 = vtanh.pop %v603
    %v607 = vrot.slane %v601, 1
    %v609 = vmul.f32 %v607, 0.0
    %v610 = vmul.f32 %v601, %v605
    %v611 = vadd.f32 %v609, %v610
    %v612 = vtanh.pop %v611
    %v613 = vrot.slane %v601, 2
    %v615 = vmul.f32 %v613, %v612
    %616 = vst [vmem:[#allocation3] sm:$0x1] %v615
    %s617 = scalar_lea.vmem [#allocation2], 1
    %v618 = vld [vmem:[%s617] ss:$8 sm:$0xf]
    %v619 = vpack.c.bf16 %v615, %v615
    %v620 = vld [vmem:[#allocation7] sm:$0xff]
    %v621 = vld [vmem:[#allocation7 + $0x8] sm:$0xff]
    %v622 = vld [vmem:[#allocation7 + $0x10] sm:$0xff]
    %v623 = vld [vmem:[#allocation7 + $0x18] sm:$0xff]
    %v624 = vld [vmem:[#allocation7 + $0x20] sm:$0xff]
    %v625 = vld [vmem:[#allocation7 + $0x28] sm:$0xff]
    %v626 = vld [vmem:[#allocation7 + $0x30] sm:$0xff]
    %v627 = vld [vmem:[#allocation7 + $0x38] sm:$0xff]
    %v628 = vld [vmem:[#allocation7 + $0x40] sm:$0xff]
    %v629 = vld [vmem:[#allocation7 + $0x48] sm:$0xff]
    %v630 = vld [vmem:[#allocation7 + $0x50] sm:$0xff]
    %v631 = vld [vmem:[#allocation7 + $0x58] sm:$0xff]
    %v632 = vld [vmem:[#allocation7 + $0x60] sm:$0xff]
    %v633 = vld [vmem:[#allocation7 + $0x68] sm:$0xff]
    %v634 = vld [vmem:[#allocation7 + $0x70] sm:$0xff]
    %v635 = vld [vmem:[#allocation7 + $0x78] sm:$0xff]
    %v636 = vld [vmem:[#allocation7 + $0x80] sm:$0xff]
    %v637 = vld [vmem:[#allocation7 + $0x88] sm:$0xff]
    %v638 = vld [vmem:[#allocation7 + $0x90] sm:$0xff]
    %v639 = vld [vmem:[#allocation7 + $0x98] sm:$0xff]
    %v640 = vld [vmem:[#allocation7 + $0xa0] sm:$0xff]
    %v641 = vld [vmem:[#allocation7 + $0xa8] sm:$0xff]
    %v642 = vld [vmem:[#allocation7 + $0xb0] sm:$0xff]
    %v643 = vld [vmem:[#allocation7 + $0xb8] sm:$0xff]
    %v644 = vld [vmem:[#allocation7 + $0xc0] sm:$0xff]
    %v645 = vld [vmem:[#allocation7 + $0xc8] sm:$0xff]
    %v646 = vld [vmem:[#allocation7 + $0xd0] sm:$0xff]
    %v647 = vld [vmem:[#allocation7 + $0xd8] sm:$0xff]
    %v648 = vld [vmem:[#allocation7 + $0xe0] sm:$0xff]
    %v649 = vld [vmem:[#allocation7 + $0xe8] sm:$0xff]
    %v650 = vld [vmem:[#allocation7 + $0xf0] sm:$0xff]
    %v651 = vld [vmem:[#allocation7 + $0xf8] sm:$0xff]
    %v684 = vunpack.c.l.b16 %v620
    %v685 = vunpack.c.h.b16 %v620
    %v686 = vunpack.c.l.b16 %v621
    %v687 = vunpack.c.h.b16 %v621
    %v688 = vunpack.c.l.b16 %v622
    %v689 = vunpack.c.h.b16 %v622
    %v690 = vunpack.c.l.b16 %v623
    %v691 = vunpack.c.h.b16 %v623
    %v692 = vunpack.c.l.b16 %v624
    %v693 = vunpack.c.h.b16 %v624
    %v694 = vunpack.c.l.b16 %v625
    %v695 = vunpack.c.h.b16 %v625
    %v696 = vunpack.c.l.b16 %v626
    %v697 = vunpack.c.h.b16 %v626
    %v698 = vunpack.c.l.b16 %v627
    %v699 = vunpack.c.h.b16 %v627
    %v700 = vunpack.c.l.b16 %v628
    %v701 = vunpack.c.h.b16 %v628
    %v702 = vunpack.c.l.b16 %v629
    %v703 = vunpack.c.h.b16 %v629
    %v704 = vunpack.c.l.b16 %v630
    %v705 = vunpack.c.h.b16 %v630
    %v706 = vunpack.c.l.b16 %v631
    %v707 = vunpack.c.h.b16 %v631
    %v708 = vunpack.c.l.b16 %v632
    %v709 = vunpack.c.h.b16 %v632
    %v710 = vunpack.c.l.b16 %v633
    %v711 = vunpack.c.h.b16 %v633
    %v712 = vunpack.c.l.b16 %v634
    %v713 = vunpack.c.h.b16 %v634
    %v714 = vunpack.c.l.b16 %v635
    %v715 = vunpack.c.h.b16 %v635
    %v716 = vunpack.c.l.b16 %v636
    %v717 = vunpack.c.h.b16 %v636
    %v718 = vunpack.c.l.b16 %v637
    %v719 = vunpack.c.h.b16 %v637
    %v720 = vunpack.c.l.b16 %v638
    %v721 = vunpack.c.h.b16 %v638
    %v722 = vunpack.c.l.b16 %v639
    %v723 = vunpack.c.h.b16 %v639
    %v724 = vunpack.c.l.b16 %v640
    %v725 = vunpack.c.h.b16 %v640
    %v726 = vunpack.c.l.b16 %v641
    %v727 = vunpack.c.h.b16 %v641
    %v728 = vunpack.c.l.b16 %v642
    %v729 = vunpack.c.h.b16 %v642
    %v730 = vunpack.c.l.b16 %v643
    %v731 = vunpack.c.h.b16 %v643
    %v732 = vunpack.c.l.b16 %v644
    %v733 = vunpack.c.h.b16 %v644
    %v734 = vunpack.c.l.b16 %v645
    %v735 = vunpack.c.h.b16 %v645
    %v736 = vunpack.c.l.b16 %v646
    %v737 = vunpack.c.h.b16 %v646
    %v738 = vunpack.c.l.b16 %v647
    %v739 = vunpack.c.h.b16 %v647
    %v740 = vunpack.c.l.b16 %v648
    %v741 = vunpack.c.h.b16 %v648
    %v742 = vunpack.c.l.b16 %v649
    %v743 = vunpack.c.h.b16 %v649
    %v744 = vunpack.c.l.b16 %v650
    %v745 = vunpack.c.h.b16 %v650
    %v746 = vunpack.c.l.b16 %v651
    %v747 = vunpack.c.h.b16 %v651
    %v748 = vpack.c.b16 %v688, %v684
    %v749 = vpack.c.b16 %v689, %v685
    %v750 = vpack.c.b16 %v690, %v686
    %v751 = vpack.c.b16 %v691, %v687
    %v752 = vpack.c.b16 %v696, %v692
    %v753 = vpack.c.b16 %v697, %v693
    %v754 = vpack.c.b16 %v698, %v694
    %v755 = vpack.c.b16 %v699, %v695
    %v756 = vpack.c.b16 %v704, %v700
    %v757 = vpack.c.b16 %v705, %v701
    %v758 = vpack.c.b16 %v706, %v702
    %v759 = vpack.c.b16 %v707, %v703
    %v760 = vpack.c.b16 %v712, %v708
    %v761 = vpack.c.b16 %v713, %v709
    %v762 = vpack.c.b16 %v714, %v710
    %v763 = vpack.c.b16 %v715, %v711
    %v764 = vpack.c.b16 %v720, %v716
    %v765 = vpack.c.b16 %v721, %v717
    %v766 = vpack.c.b16 %v722, %v718
    %v767 = vpack.c.b16 %v723, %v719
    %v768 = vpack.c.b16 %v728, %v724
    %v769 = vpack.c.b16 %v729, %v725
    %v770 = vpack.c.b16 %v730, %v726
    %v771 = vpack.c.b16 %v731, %v727
    %v772 = vpack.c.b16 %v736, %v732
    %v773 = vpack.c.b16 %v737, %v733
    %v774 = vpack.c.b16 %v738, %v734
    %v775 = vpack.c.b16 %v739, %v735
    %v776 = vpack.c.b16 %v744, %v740
    %v777 = vpack.c.b16 %v745, %v741
    %v778 = vpack.c.b16 %v746, %v742
    %v779 = vpack.c.b16 %v747, %v743
    %812 = vmatprep.subr.bf16.mxu0 %v777
    %813 = vmatpush1.bf16.msra.mxu0 %v776
    %814 = vmatprep.subr.bf16.mxu0 %v773
    %815 = vmatpush1.bf16.msra.mxu0 %v772
    %816 = vmatprep.subr.bf16.mxu0 %v769
    %817 = vmatpush1.bf16.msra.mxu0 %v768
    %818 = vmatprep.subr.bf16.mxu0 %v765
    %819 = vmatpush1.bf16.msra.mxu0 %v764
    %820 = vmatprep.subr.bf16.mxu0 %v761
    %821 = vmatpush1.bf16.msra.mxu0 %v760
    %822 = vmatprep.subr.bf16.mxu0 %v757
    %823 = vmatpush1.bf16.msra.mxu0 %v756
    %824 = vmatprep.subr.bf16.mxu0 %v753
    %825 = vmatpush1.bf16.msra.mxu0 %v752
    %826 = vmatprep.subr.bf16.mxu0 %v749
    %827 = vmatpush1.bf16.msra.mxu0 %v748
    %828 = vmatprep.subr.bf16.mxu0 0
    %829 = vmatpush2.bf16.msra.mxu0 0
    %830 = vmatprep.subr.bf16.mxu0 0
    %831 = vmatpush2.bf16.msra.mxu0 0
    %832 = vmatprep.subr.bf16.mxu0 0
    %833 = vmatpush2.bf16.msra.mxu0 0
    %834 = vmatprep.subr.bf16.mxu0 0
    %835 = vmatpush2.bf16.msra.mxu0 0
    %836 = vmatprep.subr.bf16.mxu0 0
    %837 = vmatpush2.bf16.msra.mxu0 0
    %838 = vmatprep.subr.bf16.mxu0 0
    %839 = vmatpush2.bf16.msra.mxu0 0
    %840 = vmatprep.subr.bf16.mxu0 0
    %841 = vmatpush2.bf16.msra.mxu0 0
    %842 = vmatprep.subr.bf16.mxu0 0
    %843 = vmatpush2.bf16.msra.mxu0 0
    %844 = vmatprep.mubr.bf16.mxu0 0
    %845 = vmatmul.mubr.bf16.gmra.mxu0 %v619
    %v846 = vpop.f32.mrf.mxu0
    %v847 = vadd.f32 0.0, %v846
    %v848 = vpop.f32.mrf.mxu0
    %v849 = vadd.f32 0.0, %v848
    %v850 = vpop.f32.mrf.mxu0
    %v851 = vpop.f32.mrf.mxu0
    %852 = vdwg.mxu0
    %853 = vmatprep.subr.bf16.mxu0 %v779
    %854 = vmatpush1.bf16.msra.mxu0 %v778
    %855 = vmatprep.subr.bf16.mxu0 %v775
    %856 = vmatpush1.bf16.msra.mxu0 %v774
    %857 = vmatprep.subr.bf16.mxu0 %v771
    %858 = vmatpush1.bf16.msra.mxu0 %v770
    %859 = vmatprep.subr.bf16.mxu0 %v767
    %860 = vmatpush1.bf16.msra.mxu0 %v766
    %861 = vmatprep.subr.bf16.mxu0 %v763
    %862 = vmatpush1.bf16.msra.mxu0 %v762
    %863 = vmatprep.subr.bf16.mxu0 %v759
    %864 = vmatpush1.bf16.msra.mxu0 %v758
    %865 = vmatprep.subr.bf16.mxu0 %v755
    %866 = vmatpush1.bf16.msra.mxu0 %v754
    %867 = vmatprep.subr.bf16.mxu0 %v751
    %868 = vmatpush1.bf16.msra.mxu0 %v750
    %869 = vmatprep.subr.bf16.mxu0 0
    %870 = vmatpush2.bf16.msra.mxu0 0
    %871 = vmatprep.subr.bf16.mxu0 0
    %872 = vmatpush2.bf16.msra.mxu0 0
    %873 = vmatprep.subr.bf16.mxu0 0
    %874 = vmatpush2.bf16.msra.mxu0 0
    %875 = vmatprep.subr.bf16.mxu0 0
    %876 = vmatpush2.bf16.msra.mxu0 0
    %877 = vmatprep.subr.bf16.mxu0 0
    %878 = vmatpush2.bf16.msra.mxu0 0
    %879 = vmatprep.subr.bf16.mxu0 0
    %880 = vmatpush2.bf16.msra.mxu0 0
    %881 = vmatprep.subr.bf16.mxu0 0
    %882 = vmatpush2.bf16.msra.mxu0 0
    %883 = vmatprep.subr.bf16.mxu0 0
    %884 = vmatpush2.bf16.msra.mxu0 0
    %885 = vmatprep.mubr.bf16.mxu0 0
    %886 = vmatmul.mubr.bf16.gmra.mxu0 %v619
    %v887 = vpop.f32.mrf.mxu0
    %v888 = vadd.f32 0.0, %v887
    %v889 = vpop.f32.mrf.mxu0
    %v890 = vadd.f32 0.0, %v889
    %v891 = vpop.f32.mrf.mxu0
    %v892 = vpop.f32.mrf.mxu0
    %893 = vdwg.mxu0
    %v898 = vcombine.low %v847, %v849
    %v899 = vcombine.low %v888, %v890
    %v901 = vunpack.c.l.s4 1966171168
    %v902 = vunpack.c.0.s8 %v901
    %v903 = vlaneseq
    %v904 = vshrl.u32 %v903, 7
    %v905 = vsub.s32 %v902, %v904
    %v906 = vrot.slane %v898, %v905
    %v908 = vunpack.c.l.s4 1966171168
    %v909 = vunpack.c.0.s8 %v908
    %v910 = vlaneseq
    %v911 = vshrl.u32 %v910, 7
    %v912 = vsub.s32 %v909, %v911
    %v913 = vrot.slane %v899, %v912
    %v914 = vcombine.low %v906, %v913
    %v916 = vunpack.c.l.s4 1966171168
    %v917 = vunpack.c.0.s8 %v916
    %v918 = vlaneseq
    %v919 = vshrl.u32 %v918, 7
    %v920 = vsub.s32 %v917, %v919
    %v921 = vrot.slane %v914, %v920
    %v923 = vadd.f32 %v618, %v921
    %v924 = vxor.u32 %v923, 2147483648
    %v925 = vmul.f32 %v924, 1.442695
    %v926 = vpow.pop %v925
    %v927 = vadd.f32 %v926, 1.0
    %v928 = vrcp.pop %v927
    %v929 = vmul.f32 1.0, %v928
    %v931 = vrot.slane %v923, 3
    %v933 = vtanh.pop %v931
    %v935 = vrot.slane %v929, 1
    %v937 = vmul.f32 %v935, %v611
    %v938 = vmul.f32 %v929, %v933
    %v939 = vadd.f32 %v937, %v938
    %v940 = vtanh.pop %v939
    %v941 = vrot.slane %v929, 2
    %v943 = vmul.f32 %v941, %v940
    %944 = vst [vmem:[#allocation3 + $0x1] sm:$0x1] %v943
    %s945 = scalar_lea.vmem [#allocation2], 2
    %v946 = vld [vmem:[%s945] ss:$8 sm:$0xf]
    %v947 = vpack.c.bf16 %v943, %v943
    %v948 = vld [vmem:[#allocation7] sm:$0xff]
    %v949 = vld [vmem:[#allocation7 + $0x8] sm:$0xff]
    %v950 = vld [vmem:[#allocation7 + $0x10] sm:$0xff]
    %v951 = vld [vmem:[#allocation7 + $0x18] sm:$0xff]
    %v952 = vld [vmem:[#allocation7 + $0x20] sm:$0xff]
    %v953 = vld [vmem:[#allocation7 + $0x28] sm:$0xff]
    %v954 = vld [vmem:[#allocation7 + $0x30] sm:$0xff]
    %v955 = vld [vmem:[#allocation7 + $0x38] sm:$0xff]
    %v956 = vld [vmem:[#allocation7 + $0x40] sm:$0xff]
    %v957 = vld [vmem:[#allocation7 + $0x48] sm:$0xff]
    %v958 = vld [vmem:[#allocation7 + $0x50] sm:$0xff]
    %v959 = vld [vmem:[#allocation7 + $0x58] sm:$0xff]
    %v960 = vld [vmem:[#allocation7 + $0x60] sm:$0xff]
    %v961 = vld [vmem:[#allocation7 + $0x68] sm:$0xff]
    %v962 = vld [vmem:[#allocation7 + $0x70] sm:$0xff]
    %v963 = vld [vmem:[#allocation7 + $0x78] sm:$0xff]
    %v964 = vld [vmem:[#allocation7 + $0x80] sm:$0xff]
    %v965 = vld [vmem:[#allocation7 + $0x88] sm:$0xff]
    %v966 = vld [vmem:[#allocation7 + $0x90] sm:$0xff]
    %v967 = vld [vmem:[#allocation7 + $0x98] sm:$0xff]
    %v968 = vld [vmem:[#allocation7 + $0xa0] sm:$0xff]
    %v969 = vld [vmem:[#allocation7 + $0xa8] sm:$0xff]
    %v970 = vld [vmem:[#allocation7 + $0xb0] sm:$0xff]
    %v971 = vld [vmem:[#allocation7 + $0xb8] sm:$0xff]
    %v972 = vld [vmem:[#allocation7 + $0xc0] sm:$0xff]
    %v973 = vld [vmem:[#allocation7 + $0xc8] sm:$0xff]
    %v974 = vld [vmem:[#allocation7 + $0xd0] sm:$0xff]
    %v975 = vld [vmem:[#allocation7 + $0xd8] sm:$0xff]
    %v976 = vld [vmem:[#allocation7 + $0xe0] sm:$0xff]
    %v977 = vld [vmem:[#allocation7 + $0xe8] sm:$0xff]
    %v978 = vld [vmem:[#allocation7 + $0xf0] sm:$0xff]
    %v979 = vld [vmem:[#allocation7 + $0xf8] sm:$0xff]
    %v1012 = vunpack.c.l.b16 %v948
    %v1013 = vunpack.c.h.b16 %v948
    %v1014 = vunpack.c.l.b16 %v949
    %v1015 = vunpack.c.h.b16 %v949
    %v1016 = vunpack.c.l.b16 %v950
    %v1017 = vunpack.c.h.b16 %v950
    %v1018 = vunpack.c.l.b16 %v951
    %v1019 = vunpack.c.h.b16 %v951
    %v1020 = vunpack.c.l.b16 %v952
    %v1021 = vunpack.c.h.b16 %v952
    %v1022 = vunpack.c.l.b16 %v953
    %v1023 = vunpack.c.h.b16 %v953
    %v1024 = vunpack.c.l.b16 %v954
    %v1025 = vunpack.c.h.b16 %v954
    %v1026 = vunpack.c.l.b16 %v955
    %v1027 = vunpack.c.h.b16 %v955
    %v1028 = vunpack.c.l.b16 %v956
    %v1029 = vunpack.c.h.b16 %v956
    %v1030 = vunpack.c.l.b16 %v957
    %v1031 = vunpack.c.h.b16 %v957
    %v1032 = vunpack.c.l.b16 %v958
    %v1033 = vunpack.c.h.b16 %v958
    %v1034 = vunpack.c.l.b16 %v959
    %v1035 = vunpack.c.h.b16 %v959
    %v1036 = vunpack.c.l.b16 %v960
    %v1037 = vunpack.c.h.b16 %v960
    %v1038 = vunpack.c.l.b16 %v961
    %v1039 = vunpack.c.h.b16 %v961
    %v1040 = vunpack.c.l.b16 %v962
    %v1041 = vunpack.c.h.b16 %v962
    %v1042 = vunpack.c.l.b16 %v963
    %v1043 = vunpack.c.h.b16 %v963
    %v1044 = vunpack.c.l.b16 %v964
    %v1045 = vunpack.c.h.b16 %v964
    %v1046 = vunpack.c.l.b16 %v965
    %v1047 = vunpack.c.h.b16 %v965
    %v1048 = vunpack.c.l.b16 %v966
    %v1049 = vunpack.c.h.b16 %v966
    %v1050 = vunpack.c.l.b16 %v967
    %v1051 = vunpack.c.h.b16 %v967
    %v1052 = vunpack.c.l.b16 %v968
    %v1053 = vunpack.c.h.b16 %v968
    %v1054 = vunpack.c.l.b16 %v969
    %v1055 = vunpack.c.h.b16 %v969
    %v1056 = vunpack.c.l.b16 %v970
    %v1057 = vunpack.c.h.b16 %v970
    %v1058 = vunpack.c.l.b16 %v971
    %v1059 = vunpack.c.h.b16 %v971
    %v1060 = vunpack.c.l.b16 %v972
    %v1061 = vunpack.c.h.b16 %v972
    %v1062 = vunpack.c.l.b16 %v973
    %v1063 = vunpack.c.h.b16 %v973
    %v1064 = vunpack.c.l.b16 %v974
    %v1065 = vunpack.c.h.b16 %v974
    %v1066 = vunpack.c.l.b16 %v975
    %v1067 = vunpack.c.h.b16 %v975
    %v1068 = vunpack.c.l.b16 %v976
    %v1069 = vunpack.c.h.b16 %v976
    %v1070 = vunpack.c.l.b16 %v977
    %v1071 = vunpack.c.h.b16 %v977
    %v1072 = vunpack.c.l.b16 %v978
    %v1073 = vunpack.c.h.b16 %v978
    %v1074 = vunpack.c.l.b16 %v979
    %v1075 = vunpack.c.h.b16 %v979
    %v1076 = vpack.c.b16 %v1016, %v1012
    %v1077 = vpack.c.b16 %v1017, %v1013
    %v1078 = vpack.c.b16 %v1018, %v1014
    %v1079 = vpack.c.b16 %v1019, %v1015
    %v1080 = vpack.c.b16 %v1024, %v1020
    %v1081 = vpack.c.b16 %v1025, %v1021
    %v1082 = vpack.c.b16 %v1026, %v1022
    %v1083 = vpack.c.b16 %v1027, %v1023
    %v1084 = vpack.c.b16 %v1032, %v1028
    %v1085 = vpack.c.b16 %v1033, %v1029
    %v1086 = vpack.c.b16 %v1034, %v1030
    %v1087 = vpack.c.b16 %v1035, %v1031
    %v1088 = vpack.c.b16 %v1040, %v1036
    %v1089 = vpack.c.b16 %v1041, %v1037
    %v1090 = vpack.c.b16 %v1042, %v1038
    %v1091 = vpack.c.b16 %v1043, %v1039
    %v1092 = vpack.c.b16 %v1048, %v1044
    %v1093 = vpack.c.b16 %v1049, %v1045
    %v1094 = vpack.c.b16 %v1050, %v1046
    %v1095 = vpack.c.b16 %v1051, %v1047
    %v1096 = vpack.c.b16 %v1056, %v1052
    %v1097 = vpack.c.b16 %v1057, %v1053
    %v1098 = vpack.c.b16 %v1058, %v1054
    %v1099 = vpack.c.b16 %v1059, %v1055
    %v1100 = vpack.c.b16 %v1064, %v1060
    %v1101 = vpack.c.b16 %v1065, %v1061
    %v1102 = vpack.c.b16 %v1066, %v1062
    %v1103 = vpack.c.b16 %v1067, %v1063
    %v1104 = vpack.c.b16 %v1072, %v1068
    %v1105 = vpack.c.b16 %v1073, %v1069
    %v1106 = vpack.c.b16 %v1074, %v1070
    %v1107 = vpack.c.b16 %v1075, %v1071
    %1140 = vmatprep.subr.bf16.mxu0 %v1105
    %1141 = vmatpush1.bf16.msra.mxu0 %v1104
    %1142 = vmatprep.subr.bf16.mxu0 %v1101
    %1143 = vmatpush1.bf16.msra.mxu0 %v1100
    %1144 = vmatprep.subr.bf16.mxu0 %v1097
    %1145 = vmatpush1.bf16.msra.mxu0 %v1096
    %1146 = vmatprep.subr.bf16.mxu0 %v1093
    %1147 = vmatpush1.bf16.msra.mxu0 %v1092
    %1148 = vmatprep.subr.bf16.mxu0 %v1089
    %1149 = vmatpush1.bf16.msra.mxu0 %v1088
    %1150 = vmatprep.subr.bf16.mxu0 %v1085
    %1151 = vmatpush1.bf16.msra.mxu0 %v1084
    %1152 = vmatprep.subr.bf16.mxu0 %v1081
    %1153 = vmatpush1.bf16.msra.mxu0 %v1080
    %1154 = vmatprep.subr.bf16.mxu0 %v1077
    %1155 = vmatpush1.bf16.msra.mxu0 %v1076
    %1156 = vmatprep.subr.bf16.mxu0 0
    %1157 = vmatpush2.bf16.msra.mxu0 0
    %1158 = vmatprep.subr.bf16.mxu0 0
    %1159 = vmatpush2.bf16.msra.mxu0 0
    %1160 = vmatprep.subr.bf16.mxu0 0
    %1161 = vmatpush2.bf16.msra.mxu0 0
    %1162 = vmatprep.subr.bf16.mxu0 0
    %1163 = vmatpush2.bf16.msra.mxu0 0
    %1164 = vmatprep.subr.bf16.mxu0 0
    %1165 = vmatpush2.bf16.msra.mxu0 0
    %1166 = vmatprep.subr.bf16.mxu0 0
    %1167 = vmatpush2.bf16.msra.mxu0 0
    %1168 = vmatprep.subr.bf16.mxu0 0
    %1169 = vmatpush2.bf16.msra.mxu0 0
    %1170 = vmatprep.subr.bf16.mxu0 0
    %1171 = vmatpush2.bf16.msra.mxu0 0
    %1172 = vmatprep.mubr.bf16.mxu0 0
    %1173 = vmatmul.mubr.bf16.gmra.mxu0 %v947
    %v1174 = vpop.f32.mrf.mxu0
    %v1175 = vadd.f32 0.0, %v1174
    %v1176 = vpop.f32.mrf.mxu0
    %v1177 = vadd.f32 0.0, %v1176
    %v1178 = vpop.f32.mrf.mxu0
    %v1179 = vpop.f32.mrf.mxu0
    %1180 = vdwg.mxu0
    %1181 = vmatprep.subr.bf16.mxu0 %v1107
    %1182 = vmatpush1.bf16.msra.mxu0 %v1106
    %1183 = vmatprep.subr.bf16.mxu0 %v1103
    %1184 = vmatpush1.bf16.msra.mxu0 %v1102
    %1185 = vmatprep.subr.bf16.mxu0 %v1099
    %1186 = vmatpush1.bf16.msra.mxu0 %v1098
    %1187 = vmatprep.subr.bf16.mxu0 %v1095
    %1188 = vmatpush1.bf16.msra.mxu0 %v1094
    %1189 = vmatprep.subr.bf16.mxu0 %v1091
    %1190 = vmatpush1.bf16.msra.mxu0 %v1090
    %1191 = vmatprep.subr.bf16.mxu0 %v1087
    %1192 = vmatpush1.bf16.msra.mxu0 %v1086
    %1193 = vmatprep.subr.bf16.mxu0 %v1083
    %1194 = vmatpush1.bf16.msra.mxu0 %v1082
    %1195 = vmatprep.subr.bf16.mxu0 %v1079
    %1196 = vmatpush1.bf16.msra.mxu0 %v1078
    %1197 = vmatprep.subr.bf16.mxu0 0
    %1198 = vmatpush2.bf16.msra.mxu0 0
    %1199 = vmatprep.subr.bf16.mxu0 0
    %1200 = vmatpush2.bf16.msra.mxu0 0
    %1201 = vmatprep.subr.bf16.mxu0 0
    %1202 = vmatpush2.bf16.msra.mxu0 0
    %1203 = vmatprep.subr.bf16.mxu0 0
    %1204 = vmatpush2.bf16.msra.mxu0 0
    %1205 = vmatprep.subr.bf16.mxu0 0
    %1206 = vmatpush2.bf16.msra.mxu0 0
    %1207 = vmatprep.subr.bf16.mxu0 0
    %1208 = vmatpush2.bf16.msra.mxu0 0
    %1209 = vmatprep.subr.bf16.mxu0 0
    %1210 = vmatpush2.bf16.msra.mxu0 0
    %1211 = vmatprep.subr.bf16.mxu0 0
    %1212 = vmatpush2.bf16.msra.mxu0 0
    %1213 = vmatprep.mubr.bf16.mxu0 0
    %1214 = vmatmul.mubr.bf16.gmra.mxu0 %v947
    %v1215 = vpop.f32.mrf.mxu0
    %v1216 = vadd.f32 0.0, %v1215
    %v1217 = vpop.f32.mrf.mxu0
    %v1218 = vadd.f32 0.0, %v1217
    %v1219 = vpop.f32.mrf.mxu0
    %v1220 = vpop.f32.mrf.mxu0
    %1221 = vdwg.mxu0
    %v1226 = vcombine.low %v1175, %v1177
    %v1227 = vcombine.low %v1216, %v1218
    %v1229 = vunpack.c.l.s4 1966171168
    %v1230 = vunpack.c.0.s8 %v1229
    %v1231 = vlaneseq
    %v1232 = vshrl.u32 %v1231, 7
    %v1233 = vsub.s32 %v1230, %v1232
    %v1234 = vrot.slane %v1226, %v1233
    %v1236 = vunpack.c.l.s4 1966171168
    %v1237 = vunpack.c.0.s8 %v1236
    %v1238 = vlaneseq
    %v1239 = vshrl.u32 %v1238, 7
    %v1240 = vsub.s32 %v1237, %v1239
    %v1241 = vrot.slane %v1227, %v1240
    %v1242 = vcombine.low %v1234, %v1241
    %v1244 = vunpack.c.l.s4 1966171168
    %v1245 = vunpack.c.0.s8 %v1244
    %v1246 = vlaneseq
    %v1247 = vshrl.u32 %v1246, 7
    %v1248 = vsub.s32 %v1245, %v1247
    %v1249 = vrot.slane %v1242, %v1248
    %v1251 = vadd.f32 %v946, %v1249
    %v1252 = vxor.u32 %v1251, 2147483648
    %v1253 = vmul.f32 %v1252, 1.442695
    %v1254 = vpow.pop %v1253
    %v1255 = vadd.f32 %v1254, 1.0
    %v1256 = vrcp.pop %v1255
    %v1257 = vmul.f32 1.0, %v1256
    %v1259 = vrot.slane %v1251, 3
    %v1261 = vtanh.pop %v1259
    %v1263 = vrot.slane %v1257, 1
    %v1265 = vmul.f32 %v1263, %v939
    %v1266 = vmul.f32 %v1257, %v1261
    %v1267 = vadd.f32 %v1265, %v1266
    %v1268 = vtanh.pop %v1267
    %v1269 = vrot.slane %v1257, 2
    %v1271 = vmul.f32 %v1269, %v1268
    %1272 = vst [vmem:[#allocation3 + $0x2] sm:$0x1] %v1271
    %s1273 = scalar_lea.vmem [#allocation2], 3
    %v1274 = vld [vmem:[%s1273] ss:$8 sm:$0xf]
    %v1275 = vpack.c.bf16 %v1271, %v1271
    %v1276 = vld [vmem:[#allocation7] sm:$0xff]
    %v1277 = vld [vmem:[#allocation7 + $0x8] sm:$0xff]
    %v1278 = vld [vmem:[#allocation7 + $0x10] sm:$0xff]
    %v1279 = vld [vmem:[#allocation7 + $0x18] sm:$0xff]
    %v1280 = vld [vmem:[#allocation7 + $0x20] sm:$0xff]
    %v1281 = vld [vmem:[#allocation7 + $0x28] sm:$0xff]
    %v1282 = vld [vmem:[#allocation7 + $0x30] sm:$0xff]
    %v1283 = vld [vmem:[#allocation7 + $0x38] sm:$0xff]
    %v1284 = vld [vmem:[#allocation7 + $0x40] sm:$0xff]
    %v1285 = vld [vmem:[#allocation7 + $0x48] sm:$0xff]
    %v1286 = vld [vmem:[#allocation7 + $0x50] sm:$0xff]
    %v1287 = vld [vmem:[#allocation7 + $0x58] sm:$0xff]
    %v1288 = vld [vmem:[#allocation7 + $0x60] sm:$0xff]
    %v1289 = vld [vmem:[#allocation7 + $0x68] sm:$0xff]
    %v1290 = vld [vmem:[#allocation7 + $0x70] sm:$0xff]
    %v1291 = vld [vmem:[#allocation7 + $0x78] sm:$0xff]
    %v1292 = vld [vmem:[#allocation7 + $0x80] sm:$0xff]
    %v1293 = vld [vmem:[#allocation7 + $0x88] sm:$0xff]
    %v1294 = vld [vmem:[#allocation7 + $0x90] sm:$0xff]
    %v1295 = vld [vmem:[#allocation7 + $0x98] sm:$0xff]
    %v1296 = vld [vmem:[#allocation7 + $0xa0] sm:$0xff]
    %v1297 = vld [vmem:[#allocation7 + $0xa8] sm:$0xff]
    %v1298 = vld [vmem:[#allocation7 + $0xb0] sm:$0xff]
    %v1299 = vld [vmem:[#allocation7 + $0xb8] sm:$0xff]
    %v1300 = vld [vmem:[#allocation7 + $0xc0] sm:$0xff]
    %v1301 = vld [vmem:[#allocation7 + $0xc8] sm:$0xff]
    %v1302 = vld [vmem:[#allocation7 + $0xd0] sm:$0xff]
    %v1303 = vld [vmem:[#allocation7 + $0xd8] sm:$0xff]
    %v1304 = vld [vmem:[#allocation7 + $0xe0] sm:$0xff]
    %v1305 = vld [vmem:[#allocation7 + $0xe8] sm:$0xff]
    %v1306 = vld [vmem:[#allocation7 + $0xf0] sm:$0xff]
    %v1307 = vld [vmem:[#allocation7 + $0xf8] sm:$0xff]
    %v1340 = vunpack.c.l.b16 %v1276
    %v1341 = vunpack.c.h.b16 %v1276
    %v1342 = vunpack.c.l.b16 %v1277
    %v1343 = vunpack.c.h.b16 %v1277
    %v1344 = vunpack.c.l.b16 %v1278
    %v1345 = vunpack.c.h.b16 %v1278
    %v1346 = vunpack.c.l.b16 %v1279
    %v1347 = vunpack.c.h.b16 %v1279
    %v1348 = vunpack.c.l.b16 %v1280
    %v1349 = vunpack.c.h.b16 %v1280
    %v1350 = vunpack.c.l.b16 %v1281
    %v1351 = vunpack.c.h.b16 %v1281
    %v1352 = vunpack.c.l.b16 %v1282
    %v1353 = vunpack.c.h.b16 %v1282
    %v1354 = vunpack.c.l.b16 %v1283
    %v1355 = vunpack.c.h.b16 %v1283
    %v1356 = vunpack.c.l.b16 %v1284
    %v1357 = vunpack.c.h.b16 %v1284
    %v1358 = vunpack.c.l.b16 %v1285
    %v1359 = vunpack.c.h.b16 %v1285
    %v1360 = vunpack.c.l.b16 %v1286
    %v1361 = vunpack.c.h.b16 %v1286
    %v1362 = vunpack.c.l.b16 %v1287
    %v1363 = vunpack.c.h.b16 %v1287
    %v1364 = vunpack.c.l.b16 %v1288
    %v1365 = vunpack.c.h.b16 %v1288
    %v1366 = vunpack.c.l.b16 %v1289
    %v1367 = vunpack.c.h.b16 %v1289
    %v1368 = vunpack.c.l.b16 %v1290
    %v1369 = vunpack.c.h.b16 %v1290
    %v1370 = vunpack.c.l.b16 %v1291
    %v1371 = vunpack.c.h.b16 %v1291
    %v1372 = vunpack.c.l.b16 %v1292
    %v1373 = vunpack.c.h.b16 %v1292
    %v1374 = vunpack.c.l.b16 %v1293
    %v1375 = vunpack.c.h.b16 %v1293
    %v1376 = vunpack.c.l.b16 %v1294
    %v1377 = vunpack.c.h.b16 %v1294
    %v1378 = vunpack.c.l.b16 %v1295
    %v1379 = vunpack.c.h.b16 %v1295
    %v1380 = vunpack.c.l.b16 %v1296
    %v1381 = vunpack.c.h.b16 %v1296
    %v1382 = vunpack.c.l.b16 %v1297
    %v1383 = vunpack.c.h.b16 %v1297
    %v1384 = vunpack.c.l.b16 %v1298
    %v1385 = vunpack.c.h.b16 %v1298
    %v1386 = vunpack.c.l.b16 %v1299
    %v1387 = vunpack.c.h.b16 %v1299
    %v1388 = vunpack.c.l.b16 %v1300
    %v1389 = vunpack.c.h.b16 %v1300
    %v1390 = vunpack.c.l.b16 %v1301
    %v1391 = vunpack.c.h.b16 %v1301
    %v1392 = vunpack.c.l.b16 %v1302
    %v1393 = vunpack.c.h.b16 %v1302
    %v1394 = vunpack.c.l.b16 %v1303
    %v1395 = vunpack.c.h.b16 %v1303
    %v1396 = vunpack.c.l.b16 %v1304
    %v1397 = vunpack.c.h.b16 %v1304
    %v1398 = vunpack.c.l.b16 %v1305
    %v1399 = vunpack.c.h.b16 %v1305
    %v1400 = vunpack.c.l.b16 %v1306
    %v1401 = vunpack.c.h.b16 %v1306
    %v1402 = vunpack.c.l.b16 %v1307
    %v1403 = vunpack.c.h.b16 %v1307
    %v1404 = vpack.c.b16 %v1344, %v1340
    %v1405 = vpack.c.b16 %v1345, %v1341
    %v1406 = vpack.c.b16 %v1346, %v1342
    %v1407 = vpack.c.b16 %v1347, %v1343
    %v1408 = vpack.c.b16 %v1352, %v1348
    %v1409 = vpack.c.b16 %v1353, %v1349
    %v1410 = vpack.c.b16 %v1354, %v1350
    %v1411 = vpack.c.b16 %v1355, %v1351
    %v1412 = vpack.c.b16 %v1360, %v1356
    %v1413 = vpack.c.b16 %v1361, %v1357
    %v1414 = vpack.c.b16 %v1362, %v1358
    %v1415 = vpack.c.b16 %v1363, %v1359
    %v1416 = vpack.c.b16 %v1368, %v1364
    %v1417 = vpack.c.b16 %v1369, %v1365
    %v1418 = vpack.c.b16 %v1370, %v1366
    %v1419 = vpack.c.b16 %v1371, %v1367
    %v1420 = vpack.c.b16 %v1376, %v1372
    %v1421 = vpack.c.b16 %v1377, %v1373
    %v1422 = vpack.c.b16 %v1378, %v1374
    %v1423 = vpack.c.b16 %v1379, %v1375
    %v1424 = vpack.c.b16 %v1384, %v1380
    %v1425 = vpack.c.b16 %v1385, %v1381
    %v1426 = vpack.c.b16 %v1386, %v1382
    %v1427 = vpack.c.b16 %v1387, %v1383
    %v1428 = vpack.c.b16 %v1392, %v1388
    %v1429 = vpack.c.b16 %v1393, %v1389
    %v1430 = vpack.c.b16 %v1394, %v1390
    %v1431 = vpack.c.b16 %v1395, %v1391
    %v1432 = vpack.c.b16 %v1400, %v1396
    %v1433 = vpack.c.b16 %v1401, %v1397
    %v1434 = vpack.c.b16 %v1402, %v1398
    %v1435 = vpack.c.b16 %v1403, %v1399
    %1468 = vmatprep.subr.bf16.mxu0 %v1433
    %1469 = vmatpush1.bf16.msra.mxu0 %v1432
    %1470 = vmatprep.subr.bf16.mxu0 %v1429
    %1471 = vmatpush1.bf16.msra.mxu0 %v1428
    %1472 = vmatprep.subr.bf16.mxu0 %v1425
    %1473 = vmatpush1.bf16.msra.mxu0 %v1424
    %1474 = vmatprep.subr.bf16.mxu0 %v1421
    %1475 = vmatpush1.bf16.msra.mxu0 %v1420
    %1476 = vmatprep.subr.bf16.mxu0 %v1417
    %1477 = vmatpush1.bf16.msra.mxu0 %v1416
    %1478 = vmatprep.subr.bf16.mxu0 %v1413
    %1479 = vmatpush1.bf16.msra.mxu0 %v1412
    %1480 = vmatprep.subr.bf16.mxu0 %v1409
    %1481 = vmatpush1.bf16.msra.mxu0 %v1408
    %1482 = vmatprep.subr.bf16.mxu0 %v1405
    %1483 = vmatpush1.bf16.msra.mxu0 %v1404
    %1484 = vmatprep.subr.bf16.mxu0 0
    %1485 = vmatpush2.bf16.msra.mxu0 0
    %1486 = vmatprep.subr.bf16.mxu0 0
    %1487 = vmatpush2.bf16.msra.mxu0 0
    %1488 = vmatprep.subr.bf16.mxu0 0
    %1489 = vmatpush2.bf16.msra.mxu0 0
    %1490 = vmatprep.subr.bf16.mxu0 0
    %1491 = vmatpush2.bf16.msra.mxu0 0
    %1492 = vmatprep.subr.bf16.mxu0 0
    %1493 = vmatpush2.bf16.msra.mxu0 0
    %1494 = vmatprep.subr.bf16.mxu0 0
    %1495 = vmatpush2.bf16.msra.mxu0 0
    %1496 = vmatprep.subr.bf16.mxu0 0
    %1497 = vmatpush2.bf16.msra.mxu0 0
    %1498 = vmatprep.subr.bf16.mxu0 0
    %1499 = vmatpush2.bf16.msra.mxu0 0
    %1500 = vmatprep.mubr.bf16.mxu0 0
    %1501 = vmatmul.mubr.bf16.gmra.mxu0 %v1275
    %v1502 = vpop.f32.mrf.mxu0
    %v1503 = vadd.f32 0.0, %v1502
    %v1504 = vpop.f32.mrf.mxu0
    %v1505 = vadd.f32 0.0, %v1504
    %v1506 = vpop.f32.mrf.mxu0
    %v1507 = vpop.f32.mrf.mxu0
    %1508 = vdwg.mxu0
    %1509 = vmatprep.subr.bf16.mxu0 %v1435
    %1510 = vmatpush1.bf16.msra.mxu0 %v1434
    %1511 = vmatprep.subr.bf16.mxu0 %v1431
    %1512 = vmatpush1.bf16.msra.mxu0 %v1430
    %1513 = vmatprep.subr.bf16.mxu0 %v1427
    %1514 = vmatpush1.bf16.msra.mxu0 %v1426
    %1515 = vmatprep.subr.bf16.mxu0 %v1423
    %1516 = vmatpush1.bf16.msra.mxu0 %v1422
    %1517 = vmatprep.subr.bf16.mxu0 %v1419
    %1518 = vmatpush1.bf16.msra.mxu0 %v1418
    %1519 = vmatprep.subr.bf16.mxu0 %v1415
    %1520 = vmatpush1.bf16.msra.mxu0 %v1414
    %1521 = vmatprep.subr.bf16.mxu0 %v1411
    %1522 = vmatpush1.bf16.msra.mxu0 %v1410
    %1523 = vmatprep.subr.bf16.mxu0 %v1407
    %1524 = vmatpush1.bf16.msra.mxu0 %v1406
    %1525 = vmatprep.subr.bf16.mxu0 0
    %1526 = vmatpush2.bf16.msra.mxu0 0
    %1527 = vmatprep.subr.bf16.mxu0 0
    %1528 = vmatpush2.bf16.msra.mxu0 0
    %1529 = vmatprep.subr.bf16.mxu0 0
    %1530 = vmatpush2.bf16.msra.mxu0 0
    %1531 = vmatprep.subr.bf16.mxu0 0
    %1532 = vmatpush2.bf16.msra.mxu0 0
    %1533 = vmatprep.subr.bf16.mxu0 0
    %1534 = vmatpush2.bf16.msra.mxu0 0
    %1535 = vmatprep.subr.bf16.mxu0 0
    %1536 = vmatpush2.bf16.msra.mxu0 0
    %1537 = vmatprep.subr.bf16.mxu0 0
    %1538 = vmatpush2.bf16.msra.mxu0 0
    %1539 = vmatprep.subr.bf16.mxu0 0
    %1540 = vmatpush2.bf16.msra.mxu0 0
    %1541 = vmatprep.mubr.bf16.mxu0 0
    %1542 = vmatmul.mubr.bf16.gmra.mxu0 %v1275
    %v1543 = vpop.f32.mrf.mxu0
    %v1544 = vadd.f32 0.0, %v1543
    %v1545 = vpop.f32.mrf.mxu0
    %v1546 = vadd.f32 0.0, %v1545
    %v1547 = vpop.f32.mrf.mxu0
    %v1548 = vpop.f32.mrf.mxu0
    %1549 = vdwg.mxu0
    %v1554 = vcombine.low %v1503, %v1505
    %v1555 = vcombine.low %v1544, %v1546
    %v1557 = vunpack.c.l.s4 1966171168
    %v1558 = vunpack.c.0.s8 %v1557
    %v1559 = vlaneseq
    %v1560 = vshrl.u32 %v1559, 7
    %v1561 = vsub.s32 %v1558, %v1560
    %v1562 = vrot.slane %v1554, %v1561
    %v1564 = vunpack.c.l.s4 1966171168
    %v1565 = vunpack.c.0.s8 %v1564
    %v1566 = vlaneseq
    %v1567 = vshrl.u32 %v1566, 7
    %v1568 = vsub.s32 %v1565, %v1567
    %v1569 = vrot.slane %v1555, %v1568
    %v1570 = vcombine.low %v1562, %v1569
    %v1572 = vunpack.c.l.s4 1966171168
    %v1573 = vunpack.c.0.s8 %v1572
    %v1574 = vlaneseq
    %v1575 = vshrl.u32 %v1574, 7
    %v1576 = vsub.s32 %v1573, %v1575
    %v1577 = vrot.slane %v1570, %v1576
    %v1579 = vadd.f32 %v1274, %v1577
    %v1580 = vxor.u32 %v1579, 2147483648
    %v1581 = vmul.f32 %v1580, 1.442695
    %v1582 = vpow.pop %v1581
    %v1583 = vadd.f32 %v1582, 1.0
    %v1584 = vrcp.pop %v1583
    %v1585 = vmul.f32 1.0, %v1584
    %v1587 = vrot.slane %v1579, 3
    %v1589 = vtanh.pop %v1587
    %v1591 = vrot.slane %v1585, 1
    %v1593 = vmul.f32 %v1591, %v1267
    %v1594 = vmul.f32 %v1585, %v1589
    %v1595 = vadd.f32 %v1593, %v1594
    %v1596 = vtanh.pop %v1595
    %v1597 = vrot.slane %v1585, 2
    %v1599 = vmul.f32 %v1597, %v1596
    %1600 = vst [vmem:[#allocation3 + $0x3] sm:$0x1] %v1599
    %s1601 = scalar_lea.vmem [#allocation2], 4
    %v1602 = vld [vmem:[%s1601] ss:$8 sm:$0xf]
    %v1603 = vpack.c.bf16 %v1599, %v1599
    %v1604 = vld [vmem:[#allocation7] sm:$0xff]
    %v1605 = vld [vmem:[#allocation7 + $0x8] sm:$0xff]
    %v1606 = vld [vmem:[#allocation7 + $0x10] sm:$0xff]
    %v1607 = vld [vmem:[#allocation7 + $0x18] sm:$0xff]
    %v1608 = vld [vmem:[#allocation7 + $0x20] sm:$0xff]
    %v1609 = vld [vmem:[#allocation7 + $0x28] sm:$0xff]
    %v1610 = vld [vmem:[#allocation7 + $0x30] sm:$0xff]
    %v1611 = vld [vmem:[#allocation7 + $0x38] sm:$0xff]
    %v1612 = vld [vmem:[#allocation7 + $0x40] sm:$0xff]
    %v1613 = vld [vmem:[#allocation7 + $0x48] sm:$0xff]
    %v1614 = vld [vmem:[#allocation7 + $0x50] sm:$0xff]
    %v1615 = vld [vmem:[#allocation7 + $0x58] sm:$0xff]
    %v1616 = vld [vmem:[#allocation7 + $0x60] sm:$0xff]
    %v1617 = vld [vmem:[#allocation7 + $0x68] sm:$0xff]
    %v1618 = vld [vmem:[#allocation7 + $0x70] sm:$0xff]
    %v1619 = vld [vmem:[#allocation7 + $0x78] sm:$0xff]
    %v1620 = vld [vmem:[#allocation7 + $0x80] sm:$0xff]
    %v1621 = vld [vmem:[#allocation7 + $0x88] sm:$0xff]
    %v1622 = vld [vmem:[#allocation7 + $0x90] sm:$0xff]
    %v1623 = vld [vmem:[#allocation7 + $0x98] sm:$0xff]
    %v1624 = vld [vmem:[#allocation7 + $0xa0] sm:$0xff]
    %v1625 = vld [vmem:[#allocation7 + $0xa8] sm:$0xff]
    %v1626 = vld [vmem:[#allocation7 + $0xb0] sm:$0xff]
    %v1627 = vld [vmem:[#allocation7 + $0xb8] sm:$0xff]
    %v1628 = vld [vmem:[#allocation7 + $0xc0] sm:$0xff]
    %v1629 = vld [vmem:[#allocation7 + $0xc8] sm:$0xff]
    %v1630 = vld [vmem:[#allocation7 + $0xd0] sm:$0xff]
    %v1631 = vld [vmem:[#allocation7 + $0xd8] sm:$0xff]
    %v1632 = vld [vmem:[#allocation7 + $0xe0] sm:$0xff]
    %v1633 = vld [vmem:[#allocation7 + $0xe8] sm:$0xff]
    %v1634 = vld [vmem:[#allocation7 + $0xf0] sm:$0xff]
    %v1635 = vld [vmem:[#allocation7 + $0xf8] sm:$0xff]
    %v1668 = vunpack.c.l.b16 %v1604
    %v1669 = vunpack.c.h.b16 %v1604
    %v1670 = vunpack.c.l.b16 %v1605
    %v1671 = vunpack.c.h.b16 %v1605
    %v1672 = vunpack.c.l.b16 %v1606
    %v1673 = vunpack.c.h.b16 %v1606
    %v1674 = vunpack.c.l.b16 %v1607
    %v1675 = vunpack.c.h.b16 %v1607
    %v1676 = vunpack.c.l.b16 %v1608
    %v1677 = vunpack.c.h.b16 %v1608
    %v1678 = vunpack.c.l.b16 %v1609
    %v1679 = vunpack.c.h.b16 %v1609
    %v1680 = vunpack.c.l.b16 %v1610
    %v1681 = vunpack.c.h.b16 %v1610
    %v1682 = vunpack.c.l.b16 %v1611
    %v1683 = vunpack.c.h.b16 %v1611
    %v1684 = vunpack.c.l.b16 %v1612
    %v1685 = vunpack.c.h.b16 %v1612
    %v1686 = vunpack.c.l.b16 %v1613
    %v1687 = vunpack.c.h.b16 %v1613
    %v1688 = vunpack.c.l.b16 %v1614
    %v1689 = vunpack.c.h.b16 %v1614
    %v1690 = vunpack.c.l.b16 %v1615
    %v1691 = vunpack.c.h.b16 %v1615
    %v1692 = vunpack.c.l.b16 %v1616
    %v1693 = vunpack.c.h.b16 %v1616
    %v1694 = vunpack.c.l.b16 %v1617
    %v1695 = vunpack.c.h.b16 %v1617
    %v1696 = vunpack.c.l.b16 %v1618
    %v1697 = vunpack.c.h.b16 %v1618
    %v1698 = vunpack.c.l.b16 %v1619
    %v1699 = vunpack.c.h.b16 %v1619
    %v1700 = vunpack.c.l.b16 %v1620
    %v1701 = vunpack.c.h.b16 %v1620
    %v1702 = vunpack.c.l.b16 %v1621
    %v1703 = vunpack.c.h.b16 %v1621
    %v1704 = vunpack.c.l.b16 %v1622
    %v1705 = vunpack.c.h.b16 %v1622
    %v1706 = vunpack.c.l.b16 %v1623
    %v1707 = vunpack.c.h.b16 %v1623
    %v1708 = vunpack.c.l.b16 %v1624
    %v1709 = vunpack.c.h.b16 %v1624
    %v1710 = vunpack.c.l.b16 %v1625
    %v1711 = vunpack.c.h.b16 %v1625
    %v1712 = vunpack.c.l.b16 %v1626
    %v1713 = vunpack.c.h.b16 %v1626
    %v1714 = vunpack.c.l.b16 %v1627
    %v1715 = vunpack.c.h.b16 %v1627
    %v1716 = vunpack.c.l.b16 %v1628
    %v1717 = vunpack.c.h.b16 %v1628
    %v1718 = vunpack.c.l.b16 %v1629
    %v1719 = vunpack.c.h.b16 %v1629
    %v1720 = vunpack.c.l.b16 %v1630
    %v1721 = vunpack.c.h.b16 %v1630
    %v1722 = vunpack.c.l.b16 %v1631
    %v1723 = vunpack.c.h.b16 %v1631
    %v1724 = vunpack.c.l.b16 %v1632
    %v1725 = vunpack.c.h.b16 %v1632
    %v1726 = vunpack.c.l.b16 %v1633
    %v1727 = vunpack.c.h.b16 %v1633
    %v1728 = vunpack.c.l.b16 %v1634
    %v1729 = vunpack.c.h.b16 %v1634
    %v1730 = vunpack.c.l.b16 %v1635
    %v1731 = vunpack.c.h.b16 %v1635
    %v1732 = vpack.c.b16 %v1672, %v1668
    %v1733 = vpack.c.b16 %v1673, %v1669
    %v1734 = vpack.c.b16 %v1674, %v1670
    %v1735 = vpack.c.b16 %v1675, %v1671
    %v1736 = vpack.c.b16 %v1680, %v1676
    %v1737 = vpack.c.b16 %v1681, %v1677
    %v1738 = vpack.c.b16 %v1682, %v1678
    %v1739 = vpack.c.b16 %v1683, %v1679
    %v1740 = vpack.c.b16 %v1688, %v1684
    %v1741 = vpack.c.b16 %v1689, %v1685
    %v1742 = vpack.c.b16 %v1690, %v1686
    %v1743 = vpack.c.b16 %v1691, %v1687
    %v1744 = vpack.c.b16 %v1696, %v1692
    %v1745 = vpack.c.b16 %v1697, %v1693
    %v1746 = vpack.c.b16 %v1698, %v1694
    %v1747 = vpack.c.b16 %v1699, %v1695
    %v1748 = vpack.c.b16 %v1704, %v1700
    %v1749 = vpack.c.b16 %v1705, %v1701
    %v1750 = vpack.c.b16 %v1706, %v1702
    %v1751 = vpack.c.b16 %v1707, %v1703
    %v1752 = vpack.c.b16 %v1712, %v1708
    %v1753 = vpack.c.b16 %v1713, %v1709
    %v1754 = vpack.c.b16 %v1714, %v1710
    %v1755 = vpack.c.b16 %v1715, %v1711
    %v1756 = vpack.c.b16 %v1720, %v1716
    %v1757 = vpack.c.b16 %v1721, %v1717
    %v1758 = vpack.c.b16 %v1722, %v1718
    %v1759 = vpack.c.b16 %v1723, %v1719
    %v1760 = vpack.c.b16 %v1728, %v1724
    %v1761 = vpack.c.b16 %v1729, %v1725
    %v1762 = vpack.c.b16 %v1730, %v1726
    %v1763 = vpack.c.b16 %v1731, %v1727
    %1796 = vmatprep.subr.bf16.mxu0 %v1761
    %1797 = vmatpush1.bf16.msra.mxu0 %v1760
    %1798 = vmatprep.subr.bf16.mxu0 %v1757
    %1799 = vmatpush1.bf16.msra.mxu0 %v1756
    %1800 = vmatprep.subr.bf16.mxu0 %v1753
    %1801 = vmatpush1.bf16.msra.mxu0 %v1752
    %1802 = vmatprep.subr.bf16.mxu0 %v1749
    %1803 = vmatpush1.bf16.msra.mxu0 %v1748
    %1804 = vmatprep.subr.bf16.mxu0 %v1745
    %1805 = vmatpush1.bf16.msra.mxu0 %v1744
    %1806 = vmatprep.subr.bf16.mxu0 %v1741
    %1807 = vmatpush1.bf16.msra.mxu0 %v1740
    %1808 = vmatprep.subr.bf16.mxu0 %v1737
    %1809 = vmatpush1.bf16.msra.mxu0 %v1736
    %1810 = vmatprep.subr.bf16.mxu0 %v1733
    %1811 = vmatpush1.bf16.msra.mxu0 %v1732
    %1812 = vmatprep.subr.bf16.mxu0 0
    %1813 = vmatpush2.bf16.msra.mxu0 0
    %1814 = vmatprep.subr.bf16.mxu0 0
    %1815 = vmatpush2.bf16.msra.mxu0 0
    %1816 = vmatprep.subr.bf16.mxu0 0
    %1817 = vmatpush2.bf16.msra.mxu0 0
    %1818 = vmatprep.subr.bf16.mxu0 0
    %1819 = vmatpush2.bf16.msra.mxu0 0
    %1820 = vmatprep.subr.bf16.mxu0 0
    %1821 = vmatpush2.bf16.msra.mxu0 0
    %1822 = vmatprep.subr.bf16.mxu0 0
    %1823 = vmatpush2.bf16.msra.mxu0 0
    %1824 = vmatprep.subr.bf16.mxu0 0
    %1825 = vmatpush2.bf16.msra.mxu0 0
    %1826 = vmatprep.subr.bf16.mxu0 0
    %1827 = vmatpush2.bf16.msra.mxu0 0
    %1828 = vmatprep.mubr.bf16.mxu0 0
    %1829 = vmatmul.mubr.bf16.gmra.mxu0 %v1603
    %v1830 = vpop.f32.mrf.mxu0
    %v1831 = vadd.f32 0.0, %v1830
    %v1832 = vpop.f32.mrf.mxu0
    %v1833 = vadd.f32 0.0, %v1832
    %v1834 = vpop.f32.mrf.mxu0
    %v1835 = vpop.f32.mrf.mxu0
    %1836 = vdwg.mxu0
    %1837 = vmatprep.subr.bf16.mxu0 %v1763
    %1838 = vmatpush1.bf16.msra.mxu0 %v1762
    %1839 = vmatprep.subr.bf16.mxu0 %v1759
    %1840 = vmatpush1.bf16.msra.mxu0 %v1758
    %1841 = vmatprep.subr.bf16.mxu0 %v1755
    %1842 = vmatpush1.bf16.msra.mxu0 %v1754
    %1843 = vmatprep.subr.bf16.mxu0 %v1751
    %1844 = vmatpush1.bf16.msra.mxu0 %v1750
    %1845 = vmatprep.subr.bf16.mxu0 %v1747
    %1846 = vmatpush1.bf16.msra.mxu0 %v1746
    %1847 = vmatprep.subr.bf16.mxu0 %v1743
    %1848 = vmatpush1.bf16.msra.mxu0 %v1742
    %1849 = vmatprep.subr.bf16.mxu0 %v1739
    %1850 = vmatpush1.bf16.msra.mxu0 %v1738
    %1851 = vmatprep.subr.bf16.mxu0 %v1735
    %1852 = vmatpush1.bf16.msra.mxu0 %v1734
    %1853 = vmatprep.subr.bf16.mxu0 0
    %1854 = vmatpush2.bf16.msra.mxu0 0
    %1855 = vmatprep.subr.bf16.mxu0 0
    %1856 = vmatpush2.bf16.msra.mxu0 0
    %1857 = vmatprep.subr.bf16.mxu0 0
    %1858 = vmatpush2.bf16.msra.mxu0 0
    %1859 = vmatprep.subr.bf16.mxu0 0
    %1860 = vmatpush2.bf16.msra.mxu0 0
    %1861 = vmatprep.subr.bf16.mxu0 0
    %1862 = vmatpush2.bf16.msra.mxu0 0
    %1863 = vmatprep.subr.bf16.mxu0 0
    %1864 = vmatpush2.bf16.msra.mxu0 0
    %1865 = vmatprep.subr.bf16.mxu0 0
    %1866 = vmatpush2.bf16.msra.mxu0 0
    %1867 = vmatprep.subr.bf16.mxu0 0
    %1868 = vmatpush2.bf16.msra.mxu0 0
    %1869 = vmatprep.mubr.bf16.mxu0 0
    %1870 = vmatmul.mubr.bf16.gmra.mxu0 %v1603
    %v1871 = vpop.f32.mrf.mxu0
    %v1872 = vadd.f32 0.0, %v1871
    %v1873 = vpop.f32.mrf.mxu0
    %v1874 = vadd.f32 0.0, %v1873
    %v1875 = vpop.f32.mrf.mxu0
    %v1876 = vpop.f32.mrf.mxu0
    %1877 = vdwg.mxu0
    %v1882 = vcombine.low %v1831, %v1833
    %v1883 = vcombine.low %v1872, %v1874
    %v1885 = vunpack.c.l.s4 1966171168
    %v1886 = vunpack.c.0.s8 %v1885
    %v1887 = vlaneseq
    %v1888 = vshrl.u32 %v1887, 7
    %v1889 = vsub.s32 %v1886, %v1888
    %v1890 = vrot.slane %v1882, %v1889
    %v1892 = vunpack.c.l.s4 1966171168
    %v1893 = vunpack.c.0.s8 %v1892
    %v1894 = vlaneseq
    %v1895 = vshrl.u32 %v1894, 7
    %v1896 = vsub.s32 %v1893, %v1895
    %v1897 = vrot.slane %v1883, %v1896
    %v1898 = vcombine.low %v1890, %v1897
    %v1900 = vunpack.c.l.s4 1966171168
    %v1901 = vunpack.c.0.s8 %v1900
    %v1902 = vlaneseq
    %v1903 = vshrl.u32 %v1902, 7
    %v1904 = vsub.s32 %v1901, %v1903
    %v1905 = vrot.slane %v1898, %v1904
    %v1907 = vadd.f32 %v1602, %v1905
    %v1908 = vxor.u32 %v1907, 2147483648
    %v1909 = vmul.f32 %v1908, 1.442695
    %v1910 = vpow.pop %v1909
    %v1911 = vadd.f32 %v1910, 1.0
    %v1912 = vrcp.pop %v1911
    %v1913 = vmul.f32 1.0, %v1912
    %v1915 = vrot.slane %v1907, 3
    %v1917 = vtanh.pop %v1915
    %v1919 = vrot.slane %v1913, 1
    %v1921 = vmul.f32 %v1919, %v1595
    %v1922 = vmul.f32 %v1913, %v1917
    %v1923 = vadd.f32 %v1921, %v1922
    %v1924 = vtanh.pop %v1923
    %v1925 = vrot.slane %v1913, 2
    %v1927 = vmul.f32 %v1925, %v1924
    %1928 = vst [vmem:[#allocation3 + $0x4] sm:$0x1] %v1927
    %s1929 = scalar_lea.vmem [#allocation2], 5
    %v1930 = vld [vmem:[%s1929] ss:$8 sm:$0xf]
    %v1931 = vpack.c.bf16 %v1927, %v1927
    %v1932 = vld [vmem:[#allocation7] sm:$0xff]
    %v1933 = vld [vmem:[#allocation7 + $0x8] sm:$0xff]
    %v1934 = vld [vmem:[#allocation7 + $0x10] sm:$0xff]
    %v1935 = vld [vmem:[#allocation7 + $0x18] sm:$0xff]
    %v1936 = vld [vmem:[#allocation7 + $0x20] sm:$0xff]
    %v1937 = vld [vmem:[#allocation7 + $0x28] sm:$0xff]
    %v1938 = vld [vmem:[#allocation7 + $0x30] sm:$0xff]
    %v1939 = vld [vmem:[#allocation7 + $0x38] sm:$0xff]
    %v1940 = vld [vmem:[#allocation7 + $0x40] sm:$0xff]
    %v1941 = vld [vmem:[#allocation7 + $0x48] sm:$0xff]
    %v1942 = vld [vmem:[#allocation7 + $0x50] sm:$0xff]
    %v1943 = vld [vmem:[#allocation7 + $0x58] sm:$0xff]
    %v1944 = vld [vmem:[#allocation7 + $0x60] sm:$0xff]
    %v1945 = vld [vmem:[#allocation7 + $0x68] sm:$0xff]
    %v1946 = vld [vmem:[#allocation7 + $0x70] sm:$0xff]
    %v1947 = vld [vmem:[#allocation7 + $0x78] sm:$0xff]
    %v1948 = vld [vmem:[#allocation7 + $0x80] sm:$0xff]
    %v1949 = vld [vmem:[#allocation7 + $0x88] sm:$0xff]
    %v1950 = vld [vmem:[#allocation7 + $0x90] sm:$0xff]
    %v1951 = vld [vmem:[#allocation7 + $0x98] sm:$0xff]
    %v1952 = vld [vmem:[#allocation7 + $0xa0] sm:$0xff]
    %v1953 = vld [vmem:[#allocation7 + $0xa8] sm:$0xff]
    %v1954 = vld [vmem:[#allocation7 + $0xb0] sm:$0xff]
    %v1955 = vld [vmem:[#allocation7 + $0xb8] sm:$0xff]
    %v1956 = vld [vmem:[#allocation7 + $0xc0] sm:$0xff]
    %v1957 = vld [vmem:[#allocation7 + $0xc8] sm:$0xff]
    %v1958 = vld [vmem:[#allocation7 + $0xd0] sm:$0xff]
    %v1959 = vld [vmem:[#allocation7 + $0xd8] sm:$0xff]
    %v1960 = vld [vmem:[#allocation7 + $0xe0] sm:$0xff]
    %v1961 = vld [vmem:[#allocation7 + $0xe8] sm:$0xff]
    %v1962 = vld [vmem:[#allocation7 + $0xf0] sm:$0xff]
    %v1963 = vld [vmem:[#allocation7 + $0xf8] sm:$0xff]
    %v1996 = vunpack.c.l.b16 %v1932
    %v1997 = vunpack.c.h.b16 %v1932
    %v1998 = vunpack.c.l.b16 %v1933
    %v1999 = vunpack.c.h.b16 %v1933
    %v2000 = vunpack.c.l.b16 %v1934
    %v2001 = vunpack.c.h.b16 %v1934
    %v2002 = vunpack.c.l.b16 %v1935
    %v2003 = vunpack.c.h.b16 %v1935
    %v2004 = vunpack.c.l.b16 %v1936
    %v2005 = vunpack.c.h.b16 %v1936
    %v2006 = vunpack.c.l.b16 %v1937
    %v2007 = vunpack.c.h.b16 %v1937
    %v2008 = vunpack.c.l.b16 %v1938
    %v2009 = vunpack.c.h.b16 %v1938
    %v2010 = vunpack.c.l.b16 %v1939
    %v2011 = vunpack.c.h.b16 %v1939
    %v2012 = vunpack.c.l.b16 %v1940
    %v2013 = vunpack.c.h.b16 %v1940
    %v2014 = vunpack.c.l.b16 %v1941
    %v2015 = vunpack.c.h.b16 %v1941
    %v2016 = vunpack.c.l.b16 %v1942
    %v2017 = vunpack.c.h.b16 %v1942
    %v2018 = vunpack.c.l.b16 %v1943
    %v2019 = vunpack.c.h.b16 %v1943
    %v2020 = vunpack.c.l.b16 %v1944
    %v2021 = vunpack.c.h.b16 %v1944
    %v2022 = vunpack.c.l.b16 %v1945
    %v2023 = vunpack.c.h.b16 %v1945
    %v2024 = vunpack.c.l.b16 %v1946
    %v2025 = vunpack.c.h.b16 %v1946
    %v2026 = vunpack.c.l.b16 %v1947
    %v2027 = vunpack.c.h.b16 %v1947
    %v2028 = vunpack.c.l.b16 %v1948
    %v2029 = vunpack.c.h.b16 %v1948
    %v2030 = vunpack.c.l.b16 %v1949
    %v2031 = vunpack.c.h.b16 %v1949
    %v2032 = vunpack.c.l.b16 %v1950
    %v2033 = vunpack.c.h.b16 %v1950
    %v2034 = vunpack.c.l.b16 %v1951
    %v2035 = vunpack.c.h.b16 %v1951
    %v2036 = vunpack.c.l.b16 %v1952
    %v2037 = vunpack.c.h.b16 %v1952
    %v2038 = vunpack.c.l.b16 %v1953
    %v2039 = vunpack.c.h.b16 %v1953
    %v2040 = vunpack.c.l.b16 %v1954
    %v2041 = vunpack.c.h.b16 %v1954
    %v2042 = vunpack.c.l.b16 %v1955
    %v2043 = vunpack.c.h.b16 %v1955
    %v2044 = vunpack.c.l.b16 %v1956
    %v2045 = vunpack.c.h.b16 %v1956
    %v2046 = vunpack.c.l.b16 %v1957
    %v2047 = vunpack.c.h.b16 %v1957
    %v2048 = vunpack.c.l.b16 %v1958
    %v2049 = vunpack.c.h.b16 %v1958
    %v2050 = vunpack.c.l.b16 %v1959
    %v2051 = vunpack.c.h.b16 %v1959
    %v2052 = vunpack.c.l.b16 %v1960
    %v2053 = vunpack.c.h.b16 %v1960
    %v2054 = vunpack.c.l.b16 %v1961
    %v2055 = vunpack.c.h.b16 %v1961
    %v2056 = vunpack.c.l.b16 %v1962
    %v2057 = vunpack.c.h.b16 %v1962
    %v2058 = vunpack.c.l.b16 %v1963
    %v2059 = vunpack.c.h.b16 %v1963
    %v2060 = vpack.c.b16 %v2000, %v1996
    %v2061 = vpack.c.b16 %v2001, %v1997
    %v2062 = vpack.c.b16 %v2002, %v1998
    %v2063 = vpack.c.b16 %v2003, %v1999
    %v2064 = vpack.c.b16 %v2008, %v2004
    %v2065 = vpack.c.b16 %v2009, %v2005
    %v2066 = vpack.c.b16 %v2010, %v2006
    %v2067 = vpack.c.b16 %v2011, %v2007
    %v2068 = vpack.c.b16 %v2016, %v2012
    %v2069 = vpack.c.b16 %v2017, %v2013
    %v2070 = vpack.c.b16 %v2018, %v2014
    %v2071 = vpack.c.b16 %v2019, %v2015
    %v2072 = vpack.c.b16 %v2024, %v2020
    %v2073 = vpack.c.b16 %v2025, %v2021
    %v2074 = vpack.c.b16 %v2026, %v2022
    %v2075 = vpack.c.b16 %v2027, %v2023
    %v2076 = vpack.c.b16 %v2032, %v2028
    %v2077 = vpack.c.b16 %v2033, %v2029
    %v2078 = vpack.c.b16 %v2034, %v2030
    %v2079 = vpack.c.b16 %v2035, %v2031
    %v2080 = vpack.c.b16 %v2040, %v2036
    %v2081 = vpack.c.b16 %v2041, %v2037
    %v2082 = vpack.c.b16 %v2042, %v2038
    %v2083 = vpack.c.b16 %v2043, %v2039
    %v2084 = vpack.c.b16 %v2048, %v2044
    %v2085 = vpack.c.b16 %v2049, %v2045
    %v2086 = vpack.c.b16 %v2050, %v2046
    %v2087 = vpack.c.b16 %v2051, %v2047
    %v2088 = vpack.c.b16 %v2056, %v2052
    %v2089 = vpack.c.b16 %v2057, %v2053
    %v2090 = vpack.c.b16 %v2058, %v2054
    %v2091 = vpack.c.b16 %v2059, %v2055
    %2124 = vmatprep.subr.bf16.mxu0 %v2089
    %2125 = vmatpush1.bf16.msra.mxu0 %v2088
    %2126 = vmatprep.subr.bf16.mxu0 %v2085
    %2127 = vmatpush1.bf16.msra.mxu0 %v2084
    %2128 = vmatprep.subr.bf16.mxu0 %v2081
    %2129 = vmatpush1.bf16.msra.mxu0 %v2080
    %2130 = vmatprep.subr.bf16.mxu0 %v2077
    %2131 = vmatpush1.bf16.msra.mxu0 %v2076
    %2132 = vmatprep.subr.bf16.mxu0 %v2073
    %2133 = vmatpush1.bf16.msra.mxu0 %v2072
    %2134 = vmatprep.subr.bf16.mxu0 %v2069
    %2135 = vmatpush1.bf16.msra.mxu0 %v2068
    %2136 = vmatprep.subr.bf16.mxu0 %v2065
    %2137 = vmatpush1.bf16.msra.mxu0 %v2064
    %2138 = vmatprep.subr.bf16.mxu0 %v2061
    %2139 = vmatpush1.bf16.msra.mxu0 %v2060
    %2140 = vmatprep.subr.bf16.mxu0 0
    %2141 = vmatpush2.bf16.msra.mxu0 0
    %2142 = vmatprep.subr.bf16.mxu0 0
    %2143 = vmatpush2.bf16.msra.mxu0 0
    %2144 = vmatprep.subr.bf16.mxu0 0
    %2145 = vmatpush2.bf16.msra.mxu0 0
    %2146 = vmatprep.subr.bf16.mxu0 0
    %2147 = vmatpush2.bf16.msra.mxu0 0
    %2148 = vmatprep.subr.bf16.mxu0 0
    %2149 = vmatpush2.bf16.msra.mxu0 0
    %2150 = vmatprep.subr.bf16.mxu0 0
    %2151 = vmatpush2.bf16.msra.mxu0 0
    %2152 = vmatprep.subr.bf16.mxu0 0
    %2153 = vmatpush2.bf16.msra.mxu0 0
    %2154 = vmatprep.subr.bf16.mxu0 0
    %2155 = vmatpush2.bf16.msra.mxu0 0
    %2156 = vmatprep.mubr.bf16.mxu0 0
    %2157 = vmatmul.mubr.bf16.gmra.mxu0 %v1931
    %v2158 = vpop.f32.mrf.mxu0
    %v2159 = vadd.f32 0.0, %v2158
    %v2160 = vpop.f32.mrf.mxu0
    %v2161 = vadd.f32 0.0, %v2160
    %v2162 = vpop.f32.mrf.mxu0
    %v2163 = vpop.f32.mrf.mxu0
    %2164 = vdwg.mxu0
    %2165 = vmatprep.subr.bf16.mxu0 %v2091
    %2166 = vmatpush1.bf16.msra.mxu0 %v2090
    %2167 = vmatprep.subr.bf16.mxu0 %v2087
    %2168 = vmatpush1.bf16.msra.mxu0 %v2086
    %2169 = vmatprep.subr.bf16.mxu0 %v2083
    %2170 = vmatpush1.bf16.msra.mxu0 %v2082
    %2171 = vmatprep.subr.bf16.mxu0 %v2079
    %2172 = vmatpush1.bf16.msra.mxu0 %v2078
    %2173 = vmatprep.subr.bf16.mxu0 %v2075
    %2174 = vmatpush1.bf16.msra.mxu0 %v2074
    %2175 = vmatprep.subr.bf16.mxu0 %v2071
    %2176 = vmatpush1.bf16.msra.mxu0 %v2070
    %2177 = vmatprep.subr.bf16.mxu0 %v2067
    %2178 = vmatpush1.bf16.msra.mxu0 %v2066
    %2179 = vmatprep.subr.bf16.mxu0 %v2063
    %2180 = vmatpush1.bf16.msra.mxu0 %v2062
    %2181 = vmatprep.subr.bf16.mxu0 0
    %2182 = vmatpush2.bf16.msra.mxu0 0
    %2183 = vmatprep.subr.bf16.mxu0 0
    %2184 = vmatpush2.bf16.msra.mxu0 0
    %2185 = vmatprep.subr.bf16.mxu0 0
    %2186 = vmatpush2.bf16.msra.mxu0 0
    %2187 = vmatprep.subr.bf16.mxu0 0
    %2188 = vmatpush2.bf16.msra.mxu0 0
    %2189 = vmatprep.subr.bf16.mxu0 0
    %2190 = vmatpush2.bf16.msra.mxu0 0
    %2191 = vmatprep.subr.bf16.mxu0 0
    %2192 = vmatpush2.bf16.msra.mxu0 0
    %2193 = vmatprep.subr.bf16.mxu0 0
    %2194 = vmatpush2.bf16.msra.mxu0 0
    %2195 = vmatprep.subr.bf16.mxu0 0
    %2196 = vmatpush2.bf16.msra.mxu0 0
    %2197 = vmatprep.mubr.bf16.mxu0 0
    %2198 = vmatmul.mubr.bf16.gmra.mxu0 %v1931
    %v2199 = vpop.f32.mrf.mxu0
    %v2200 = vadd.f32 0.0, %v2199
    %v2201 = vpop.f32.mrf.mxu0
    %v2202 = vadd.f32 0.0, %v2201
    %v2203 = vpop.f32.mrf.mxu0
    %v2204 = vpop.f32.mrf.mxu0
    %2205 = vdwg.mxu0
    %v2210 = vcombine.low %v2159, %v2161
    %v2211 = vcombine.low %v2200, %v2202
    %v2213 = vunpack.c.l.s4 1966171168
    %v2214 = vunpack.c.0.s8 %v2213
    %v2215 = vlaneseq
    %v2216 = vshrl.u32 %v2215, 7
    %v2217 = vsub.s32 %v2214, %v2216
    %v2218 = vrot.slane %v2210, %v2217
    %v2220 = vunpack.c.l.s4 1966171168
    %v2221 = vunpack.c.0.s8 %v2220
    %v2222 = vlaneseq
    %v2223 = vshrl.u32 %v2222, 7
    %v2224 = vsub.s32 %v2221, %v2223
    %v2225 = vrot.slane %v2211, %v2224
    %v2226 = vcombine.low %v2218, %v2225
    %v2228 = vunpack.c.l.s4 1966171168
    %v2229 = vunpack.c.0.s8 %v2228
    %v2230 = vlaneseq
    %v2231 = vshrl.u32 %v2230, 7
    %v2232 = vsub.s32 %v2229, %v2231
    %v2233 = vrot.slane %v2226, %v2232
    %v2235 = vadd.f32 %v1930, %v2233
    %v2236 = vxor.u32 %v2235, 2147483648
    %v2237 = vmul.f32 %v2236, 1.442695
    %v2238 = vpow.pop %v2237
    %v2239 = vadd.f32 %v2238, 1.0
    %v2240 = vrcp.pop %v2239
    %v2241 = vmul.f32 1.0, %v2240
    %v2243 = vrot.slane %v2235, 3
    %v2245 = vtanh.pop %v2243
    %v2247 = vrot.slane %v2241, 1
    %v2249 = vmul.f32 %v2247, %v1923
    %v2250 = vmul.f32 %v2241, %v2245
    %v2251 = vadd.f32 %v2249, %v2250
    %v2252 = vtanh.pop %v2251
    %v2253 = vrot.slane %v2241, 2
    %v2255 = vmul.f32 %v2253, %v2252
    %2256 = vst [vmem:[#allocation3 + $0x5] sm:$0x1] %v2255
    %s2257 = scalar_lea.vmem [#allocation2], 6
    %v2258 = vld [vmem:[%s2257] ss:$8 sm:$0xf]
    %v2259 = vpack.c.bf16 %v2255, %v2255
    %v2260 = vld [vmem:[#allocation7] sm:$0xff]
    %v2261 = vld [vmem:[#allocation7 + $0x8] sm:$0xff]
    %v2262 = vld [vmem:[#allocation7 + $0x10] sm:$0xff]
    %v2263 = vld [vmem:[#allocation7 + $0x18] sm:$0xff]
    %v2264 = vld [vmem:[#allocation7 + $0x20] sm:$0xff]
    %v2265 = vld [vmem:[#allocation7 + $0x28] sm:$0xff]
    %v2266 = vld [vmem:[#allocation7 + $0x30] sm:$0xff]
    %v2267 = vld [vmem:[#allocation7 + $0x38] sm:$0xff]
    %v2268 = vld [vmem:[#allocation7 + $0x40] sm:$0xff]
    %v2269 = vld [vmem:[#allocation7 + $0x48] sm:$0xff]
    %v2270 = vld [vmem:[#allocation7 + $0x50] sm:$0xff]
    %v2271 = vld [vmem:[#allocation7 + $0x58] sm:$0xff]
    %v2272 = vld [vmem:[#allocation7 + $0x60] sm:$0xff]
    %v2273 = vld [vmem:[#allocation7 + $0x68] sm:$0xff]
    %v2274 = vld [vmem:[#allocation7 + $0x70] sm:$0xff]
    %v2275 = vld [vmem:[#allocation7 + $0x78] sm:$0xff]
    %v2276 = vld [vmem:[#allocation7 + $0x80] sm:$0xff]
    %v2277 = vld [vmem:[#allocation7 + $0x88] sm:$0xff]
    %v2278 = vld [vmem:[#allocation7 + $0x90] sm:$0xff]
    %v2279 = vld [vmem:[#allocation7 + $0x98] sm:$0xff]
    %v2280 = vld [vmem:[#allocation7 + $0xa0] sm:$0xff]
    %v2281 = vld [vmem:[#allocation7 + $0xa8] sm:$0xff]
    %v2282 = vld [vmem:[#allocation7 + $0xb0] sm:$0xff]
    %v2283 = vld [vmem:[#allocation7 + $0xb8] sm:$0xff]
    %v2284 = vld [vmem:[#allocation7 + $0xc0] sm:$0xff]
    %v2285 = vld [vmem:[#allocation7 + $0xc8] sm:$0xff]
    %v2286 = vld [vmem:[#allocation7 + $0xd0] sm:$0xff]
    %v2287 = vld [vmem:[#allocation7 + $0xd8] sm:$0xff]
    %v2288 = vld [vmem:[#allocation7 + $0xe0] sm:$0xff]
    %v2289 = vld [vmem:[#allocation7 + $0xe8] sm:$0xff]
    %v2290 = vld [vmem:[#allocation7 + $0xf0] sm:$0xff]
    %v2291 = vld [vmem:[#allocation7 + $0xf8] sm:$0xff]
    %v2324 = vunpack.c.l.b16 %v2260
    %v2325 = vunpack.c.h.b16 %v2260
    %v2326 = vunpack.c.l.b16 %v2261
    %v2327 = vunpack.c.h.b16 %v2261
    %v2328 = vunpack.c.l.b16 %v2262
    %v2329 = vunpack.c.h.b16 %v2262
    %v2330 = vunpack.c.l.b16 %v2263
    %v2331 = vunpack.c.h.b16 %v2263
    %v2332 = vunpack.c.l.b16 %v2264
    %v2333 = vunpack.c.h.b16 %v2264
    %v2334 = vunpack.c.l.b16 %v2265
    %v2335 = vunpack.c.h.b16 %v2265
    %v2336 = vunpack.c.l.b16 %v2266
    %v2337 = vunpack.c.h.b16 %v2266
    %v2338 = vunpack.c.l.b16 %v2267
    %v2339 = vunpack.c.h.b16 %v2267
    %v2340 = vunpack.c.l.b16 %v2268
    %v2341 = vunpack.c.h.b16 %v2268
    %v2342 = vunpack.c.l.b16 %v2269
    %v2343 = vunpack.c.h.b16 %v2269
    %v2344 = vunpack.c.l.b16 %v2270
    %v2345 = vunpack.c.h.b16 %v2270
    %v2346 = vunpack.c.l.b16 %v2271
    %v2347 = vunpack.c.h.b16 %v2271
    %v2348 = vunpack.c.l.b16 %v2272
    %v2349 = vunpack.c.h.b16 %v2272
    %v2350 = vunpack.c.l.b16 %v2273
    %v2351 = vunpack.c.h.b16 %v2273
    %v2352 = vunpack.c.l.b16 %v2274
    %v2353 = vunpack.c.h.b16 %v2274
    %v2354 = vunpack.c.l.b16 %v2275
    %v2355 = vunpack.c.h.b16 %v2275
    %v2356 = vunpack.c.l.b16 %v2276
    %v2357 = vunpack.c.h.b16 %v2276
    %v2358 = vunpack.c.l.b16 %v2277
    %v2359 = vunpack.c.h.b16 %v2277
    %v2360 = vunpack.c.l.b16 %v2278
    %v2361 = vunpack.c.h.b16 %v2278
    %v2362 = vunpack.c.l.b16 %v2279
    %v2363 = vunpack.c.h.b16 %v2279
    %v2364 = vunpack.c.l.b16 %v2280
    %v2365 = vunpack.c.h.b16 %v2280
    %v2366 = vunpack.c.l.b16 %v2281
    %v2367 = vunpack.c.h.b16 %v2281
    %v2368 = vunpack.c.l.b16 %v2282
    %v2369 = vunpack.c.h.b16 %v2282
    %v2370 = vunpack.c.l.b16 %v2283
    %v2371 = vunpack.c.h.b16 %v2283
    %v2372 = vunpack.c.l.b16 %v2284
    %v2373 = vunpack.c.h.b16 %v2284
    %v2374 = vunpack.c.l.b16 %v2285
    %v2375 = vunpack.c.h.b16 %v2285
    %v2376 = vunpack.c.l.b16 %v2286
    %v2377 = vunpack.c.h.b16 %v2286
    %v2378 = vunpack.c.l.b16 %v2287
    %v2379 = vunpack.c.h.b16 %v2287
    %v2380 = vunpack.c.l.b16 %v2288
    %v2381 = vunpack.c.h.b16 %v2288
    %v2382 = vunpack.c.l.b16 %v2289
    %v2383 = vunpack.c.h.b16 %v2289
    %v2384 = vunpack.c.l.b16 %v2290
    %v2385 = vunpack.c.h.b16 %v2290
    %v2386 = vunpack.c.l.b16 %v2291
    %v2387 = vunpack.c.h.b16 %v2291
    %v2388 = vpack.c.b16 %v2328, %v2324
    %v2389 = vpack.c.b16 %v2329, %v2325
    %v2390 = vpack.c.b16 %v2330, %v2326
    %v2391 = vpack.c.b16 %v2331, %v2327
    %v2392 = vpack.c.b16 %v2336, %v2332
    %v2393 = vpack.c.b16 %v2337, %v2333
    %v2394 = vpack.c.b16 %v2338, %v2334
    %v2395 = vpack.c.b16 %v2339, %v2335
    %v2396 = vpack.c.b16 %v2344, %v2340
    %v2397 = vpack.c.b16 %v2345, %v2341
    %v2398 = vpack.c.b16 %v2346, %v2342
    %v2399 = vpack.c.b16 %v2347, %v2343
    %v2400 = vpack.c.b16 %v2352, %v2348
    %v2401 = vpack.c.b16 %v2353, %v2349
    %v2402 = vpack.c.b16 %v2354, %v2350
    %v2403 = vpack.c.b16 %v2355, %v2351
    %v2404 = vpack.c.b16 %v2360, %v2356
    %v2405 = vpack.c.b16 %v2361, %v2357
    %v2406 = vpack.c.b16 %v2362, %v2358
    %v2407 = vpack.c.b16 %v2363, %v2359
    %v2408 = vpack.c.b16 %v2368, %v2364
    %v2409 = vpack.c.b16 %v2369, %v2365
    %v2410 = vpack.c.b16 %v2370, %v2366
    %v2411 = vpack.c.b16 %v2371, %v2367
    %v2412 = vpack.c.b16 %v2376, %v2372
    %v2413 = vpack.c.b16 %v2377, %v2373
    %v2414 = vpack.c.b16 %v2378, %v2374
    %v2415 = vpack.c.b16 %v2379, %v2375
    %v2416 = vpack.c.b16 %v2384, %v2380
    %v2417 = vpack.c.b16 %v2385, %v2381
    %v2418 = vpack.c.b16 %v2386, %v2382
    %v2419 = vpack.c.b16 %v2387, %v2383
    %2452 = vmatprep.subr.bf16.mxu0 %v2417
    %2453 = vmatpush1.bf16.msra.mxu0 %v2416
    %2454 = vmatprep.subr.bf16.mxu0 %v2413
    %2455 = vmatpush1.bf16.msra.mxu0 %v2412
    %2456 = vmatprep.subr.bf16.mxu0 %v2409
    %2457 = vmatpush1.bf16.msra.mxu0 %v2408
    %2458 = vmatprep.subr.bf16.mxu0 %v2405
    %2459 = vmatpush1.bf16.msra.mxu0 %v2404
    %2460 = vmatprep.subr.bf16.mxu0 %v2401
    %2461 = vmatpush1.bf16.msra.mxu0 %v2400
    %2462 = vmatprep.subr.bf16.mxu0 %v2397
    %2463 = vmatpush1.bf16.msra.mxu0 %v2396
    %2464 = vmatprep.subr.bf16.mxu0 %v2393
    %2465 = vmatpush1.bf16.msra.mxu0 %v2392
    %2466 = vmatprep.subr.bf16.mxu0 %v2389
    %2467 = vmatpush1.bf16.msra.mxu0 %v2388
    %2468 = vmatprep.subr.bf16.mxu0 0
    %2469 = vmatpush2.bf16.msra.mxu0 0
    %2470 = vmatprep.subr.bf16.mxu0 0
    %2471 = vmatpush2.bf16.msra.mxu0 0
    %2472 = vmatprep.subr.bf16.mxu0 0
    %2473 = vmatpush2.bf16.msra.mxu0 0
    %2474 = vmatprep.subr.bf16.mxu0 0
    %2475 = vmatpush2.bf16.msra.mxu0 0
    %2476 = vmatprep.subr.bf16.mxu0 0
    %2477 = vmatpush2.bf16.msra.mxu0 0
    %2478 = vmatprep.subr.bf16.mxu0 0
    %2479 = vmatpush2.bf16.msra.mxu0 0
    %2480 = vmatprep.subr.bf16.mxu0 0
    %2481 = vmatpush2.bf16.msra.mxu0 0
    %2482 = vmatprep.subr.bf16.mxu0 0
    %2483 = vmatpush2.bf16.msra.mxu0 0
    %2484 = vmatprep.mubr.bf16.mxu0 0
    %2485 = vmatmul.mubr.bf16.gmra.mxu0 %v2259
    %v2486 = vpop.f32.mrf.mxu0
    %v2487 = vadd.f32 0.0, %v2486
    %v2488 = vpop.f32.mrf.mxu0
    %v2489 = vadd.f32 0.0, %v2488
    %v2490 = vpop.f32.mrf.mxu0
    %v2491 = vpop.f32.mrf.mxu0
    %2492 = vdwg.mxu0
    %2493 = vmatprep.subr.bf16.mxu0 %v2419
    %2494 = vmatpush1.bf16.msra.mxu0 %v2418
    %2495 = vmatprep.subr.bf16.mxu0 %v2415
    %2496 = vmatpush1.bf16.msra.mxu0 %v2414
    %2497 = vmatprep.subr.bf16.mxu0 %v2411
    %2498 = vmatpush1.bf16.msra.mxu0 %v2410
    %2499 = vmatprep.subr.bf16.mxu0 %v2407
    %2500 = vmatpush1.bf16.msra.mxu0 %v2406
    %2501 = vmatprep.subr.bf16.mxu0 %v2403
    %2502 = vmatpush1.bf16.msra.mxu0 %v2402
    %2503 = vmatprep.subr.bf16.mxu0 %v2399
    %2504 = vmatpush1.bf16.msra.mxu0 %v2398
    %2505 = vmatprep.subr.bf16.mxu0 %v2395
    %2506 = vmatpush1.bf16.msra.mxu0 %v2394
    %2507 = vmatprep.subr.bf16.mxu0 %v2391
    %2508 = vmatpush1.bf16.msra.mxu0 %v2390
    %2509 = vmatprep.subr.bf16.mxu0 0
    %2510 = vmatpush2.bf16.msra.mxu0 0
    %2511 = vmatprep.subr.bf16.mxu0 0
    %2512 = vmatpush2.bf16.msra.mxu0 0
    %2513 = vmatprep.subr.bf16.mxu0 0
    %2514 = vmatpush2.bf16.msra.mxu0 0
    %2515 = vmatprep.subr.bf16.mxu0 0
    %2516 = vmatpush2.bf16.msra.mxu0 0
    %2517 = vmatprep.subr.bf16.mxu0 0
    %2518 = vmatpush2.bf16.msra.mxu0 0
    %2519 = vmatprep.subr.bf16.mxu0 0
    %2520 = vmatpush2.bf16.msra.mxu0 0
    %2521 = vmatprep.subr.bf16.mxu0 0
    %2522 = vmatpush2.bf16.msra.mxu0 0
    %2523 = vmatprep.subr.bf16.mxu0 0
    %2524 = vmatpush2.bf16.msra.mxu0 0
    %2525 = vmatprep.mubr.bf16.mxu0 0
    %2526 = vmatmul.mubr.bf16.gmra.mxu0 %v2259
    %v2527 = vpop.f32.mrf.mxu0
    %v2528 = vadd.f32 0.0, %v2527
    %v2529 = vpop.f32.mrf.mxu0
    %v2530 = vadd.f32 0.0, %v2529
    %v2531 = vpop.f32.mrf.mxu0
    %v2532 = vpop.f32.mrf.mxu0
    %2533 = vdwg.mxu0
    %v2538 = vcombine.low %v2487, %v2489
    %v2539 = vcombine.low %v2528, %v2530
    %v2541 = vunpack.c.l.s4 1966171168
    %v2542 = vunpack.c.0.s8 %v2541
    %v2543 = vlaneseq
    %v2544 = vshrl.u32 %v2543, 7
    %v2545 = vsub.s32 %v2542, %v2544
    %v2546 = vrot.slane %v2538, %v2545
    %v2548 = vunpack.c.l.s4 1966171168
    %v2549 = vunpack.c.0.s8 %v2548
    %v2550 = vlaneseq
    %v2551 = vshrl.u32 %v2550, 7
    %v2552 = vsub.s32 %v2549, %v2551
    %v2553 = vrot.slane %v2539, %v2552
    %v2554 = vcombine.low %v2546, %v2553
    %v2556 = vunpack.c.l.s4 1966171168
    %v2557 = vunpack.c.0.s8 %v2556
    %v2558 = vlaneseq
    %v2559 = vshrl.u32 %v2558, 7
    %v2560 = vsub.s32 %v2557, %v2559
    %v2561 = vrot.slane %v2554, %v2560
    %v2563 = vadd.f32 %v2258, %v2561
    %v2564 = vxor.u32 %v2563, 2147483648
    %v2565 = vmul.f32 %v2564, 1.442695
    %v2566 = vpow.pop %v2565
    %v2567 = vadd.f32 %v2566, 1.0
    %v2568 = vrcp.pop %v2567
    %v2569 = vmul.f32 1.0, %v2568
    %v2571 = vrot.slane %v2563, 3
    %v2573 = vtanh.pop %v2571
    %v2575 = vrot.slane %v2569, 1
    %v2577 = vmul.f32 %v2575, %v2251
    %v2578 = vmul.f32 %v2569, %v2573
    %v2579 = vadd.f32 %v2577, %v2578
    %v2580 = vtanh.pop %v2579
    %v2581 = vrot.slane %v2569, 2
    %v2583 = vmul.f32 %v2581, %v2580
    %2584 = vst [vmem:[#allocation3 + $0x6] sm:$0x1] %v2583
    %s2585 = scalar_lea.vmem [#allocation2], 7
    %v2586 = vld [vmem:[%s2585] ss:$8 sm:$0xf]
    %v2587 = vpack.c.bf16 %v2583, %v2583
    %v2588 = vld [vmem:[#allocation7] sm:$0xff]
    %v2589 = vld [vmem:[#allocation7 + $0x8] sm:$0xff]
    %v2590 = vld [vmem:[#allocation7 + $0x10] sm:$0xff]
    %v2591 = vld [vmem:[#allocation7 + $0x18] sm:$0xff]
    %v2592 = vld [vmem:[#allocation7 + $0x20] sm:$0xff]
    %v2593 = vld [vmem:[#allocation7 + $0x28] sm:$0xff]
    %v2594 = vld [vmem:[#allocation7 + $0x30] sm:$0xff]
    %v2595 = vld [vmem:[#allocation7 + $0x38] sm:$0xff]
    %v2596 = vld [vmem:[#allocation7 + $0x40] sm:$0xff]
    %v2597 = vld [vmem:[#allocation7 + $0x48] sm:$0xff]
    %v2598 = vld [vmem:[#allocation7 + $0x50] sm:$0xff]
    %v2599 = vld [vmem:[#allocation7 + $0x58] sm:$0xff]
    %v2600 = vld [vmem:[#allocation7 + $0x60] sm:$0xff]
    %v2601 = vld [vmem:[#allocation7 + $0x68] sm:$0xff]
    %v2602 = vld [vmem:[#allocation7 + $0x70] sm:$0xff]
    %v2603 = vld [vmem:[#allocation7 + $0x78] sm:$0xff]
    %v2604 = vld [vmem:[#allocation7 + $0x80] sm:$0xff]
    %v2605 = vld [vmem:[#allocation7 + $0x88] sm:$0xff]
    %v2606 = vld [vmem:[#allocation7 + $0x90] sm:$0xff]
    %v2607 = vld [vmem:[#allocation7 + $0x98] sm:$0xff]
    %v2608 = vld [vmem:[#allocation7 + $0xa0] sm:$0xff]
    %v2609 = vld [vmem:[#allocation7 + $0xa8] sm:$0xff]
    %v2610 = vld [vmem:[#allocation7 + $0xb0] sm:$0xff]
    %v2611 = vld [vmem:[#allocation7 + $0xb8] sm:$0xff]
    %v2612 = vld [vmem:[#allocation7 + $0xc0] sm:$0xff]
    %v2613 = vld [vmem:[#allocation7 + $0xc8] sm:$0xff]
    %v2614 = vld [vmem:[#allocation7 + $0xd0] sm:$0xff]
    %v2615 = vld [vmem:[#allocation7 + $0xd8] sm:$0xff]
    %v2616 = vld [vmem:[#allocation7 + $0xe0] sm:$0xff]
    %v2617 = vld [vmem:[#allocation7 + $0xe8] sm:$0xff]
    %v2618 = vld [vmem:[#allocation7 + $0xf0] sm:$0xff]
    %v2619 = vld [vmem:[#allocation7 + $0xf8] sm:$0xff]
    %v2652 = vunpack.c.l.b16 %v2588
    %v2653 = vunpack.c.h.b16 %v2588
    %v2654 = vunpack.c.l.b16 %v2589
    %v2655 = vunpack.c.h.b16 %v2589
    %v2656 = vunpack.c.l.b16 %v2590
    %v2657 = vunpack.c.h.b16 %v2590
    %v2658 = vunpack.c.l.b16 %v2591
    %v2659 = vunpack.c.h.b16 %v2591
    %v2660 = vunpack.c.l.b16 %v2592
    %v2661 = vunpack.c.h.b16 %v2592
    %v2662 = vunpack.c.l.b16 %v2593
    %v2663 = vunpack.c.h.b16 %v2593
    %v2664 = vunpack.c.l.b16 %v2594
    %v2665 = vunpack.c.h.b16 %v2594
    %v2666 = vunpack.c.l.b16 %v2595
    %v2667 = vunpack.c.h.b16 %v2595
    %v2668 = vunpack.c.l.b16 %v2596
    %v2669 = vunpack.c.h.b16 %v2596
    %v2670 = vunpack.c.l.b16 %v2597
    %v2671 = vunpack.c.h.b16 %v2597
    %v2672 = vunpack.c.l.b16 %v2598
    %v2673 = vunpack.c.h.b16 %v2598
    %v2674 = vunpack.c.l.b16 %v2599
    %v2675 = vunpack.c.h.b16 %v2599
    %v2676 = vunpack.c.l.b16 %v2600
    %v2677 = vunpack.c.h.b16 %v2600
    %v2678 = vunpack.c.l.b16 %v2601
    %v2679 = vunpack.c.h.b16 %v2601
    %v2680 = vunpack.c.l.b16 %v2602
    %v2681 = vunpack.c.h.b16 %v2602
    %v2682 = vunpack.c.l.b16 %v2603
    %v2683 = vunpack.c.h.b16 %v2603
    %v2684 = vunpack.c.l.b16 %v2604
    %v2685 = vunpack.c.h.b16 %v2604
    %v2686 = vunpack.c.l.b16 %v2605
    %v2687 = vunpack.c.h.b16 %v2605
    %v2688 = vunpack.c.l.b16 %v2606
    %v2689 = vunpack.c.h.b16 %v2606
    %v2690 = vunpack.c.l.b16 %v2607
    %v2691 = vunpack.c.h.b16 %v2607
    %v2692 = vunpack.c.l.b16 %v2608
    %v2693 = vunpack.c.h.b16 %v2608
    %v2694 = vunpack.c.l.b16 %v2609
    %v2695 = vunpack.c.h.b16 %v2609
    %v2696 = vunpack.c.l.b16 %v2610
    %v2697 = vunpack.c.h.b16 %v2610
    %v2698 = vunpack.c.l.b16 %v2611
    %v2699 = vunpack.c.h.b16 %v2611
    %v2700 = vunpack.c.l.b16 %v2612
    %v2701 = vunpack.c.h.b16 %v2612
    %v2702 = vunpack.c.l.b16 %v2613
    %v2703 = vunpack.c.h.b16 %v2613
    %v2704 = vunpack.c.l.b16 %v2614
    %v2705 = vunpack.c.h.b16 %v2614
    %v2706 = vunpack.c.l.b16 %v2615
    %v2707 = vunpack.c.h.b16 %v2615
    %v2708 = vunpack.c.l.b16 %v2616
    %v2709 = vunpack.c.h.b16 %v2616
    %v2710 = vunpack.c.l.b16 %v2617
    %v2711 = vunpack.c.h.b16 %v2617
    %v2712 = vunpack.c.l.b16 %v2618
    %v2713 = vunpack.c.h.b16 %v2618
    %v2714 = vunpack.c.l.b16 %v2619
    %v2715 = vunpack.c.h.b16 %v2619
    %v2716 = vpack.c.b16 %v2656, %v2652
    %v2717 = vpack.c.b16 %v2657, %v2653
    %v2718 = vpack.c.b16 %v2658, %v2654
    %v2719 = vpack.c.b16 %v2659, %v2655
    %v2720 = vpack.c.b16 %v2664, %v2660
    %v2721 = vpack.c.b16 %v2665, %v2661
    %v2722 = vpack.c.b16 %v2666, %v2662
    %v2723 = vpack.c.b16 %v2667, %v2663
    %v2724 = vpack.c.b16 %v2672, %v2668
    %v2725 = vpack.c.b16 %v2673, %v2669
    %v2726 = vpack.c.b16 %v2674, %v2670
    %v2727 = vpack.c.b16 %v2675, %v2671
    %v2728 = vpack.c.b16 %v2680, %v2676
    %v2729 = vpack.c.b16 %v2681, %v2677
    %v2730 = vpack.c.b16 %v2682, %v2678
    %v2731 = vpack.c.b16 %v2683, %v2679
    %v2732 = vpack.c.b16 %v2688, %v2684
    %v2733 = vpack.c.b16 %v2689, %v2685
    %v2734 = vpack.c.b16 %v2690, %v2686
    %v2735 = vpack.c.b16 %v2691, %v2687
    %v2736 = vpack.c.b16 %v2696, %v2692
    %v2737 = vpack.c.b16 %v2697, %v2693
    %v2738 = vpack.c.b16 %v2698, %v2694
    %v2739 = vpack.c.b16 %v2699, %v2695
    %v2740 = vpack.c.b16 %v2704, %v2700
    %v2741 = vpack.c.b16 %v2705, %v2701
    %v2742 = vpack.c.b16 %v2706, %v2702
    %v2743 = vpack.c.b16 %v2707, %v2703
    %v2744 = vpack.c.b16 %v2712, %v2708
    %v2745 = vpack.c.b16 %v2713, %v2709
    %v2746 = vpack.c.b16 %v2714, %v2710
    %v2747 = vpack.c.b16 %v2715, %v2711
    %2780 = vmatprep.subr.bf16.mxu0 %v2745
    %2781 = vmatpush1.bf16.msra.mxu0 %v2744
    %2782 = vmatprep.subr.bf16.mxu0 %v2741
    %2783 = vmatpush1.bf16.msra.mxu0 %v2740
    %2784 = vmatprep.subr.bf16.mxu0 %v2737
    %2785 = vmatpush1.bf16.msra.mxu0 %v2736
    %2786 = vmatprep.subr.bf16.mxu0 %v2733
    %2787 = vmatpush1.bf16.msra.mxu0 %v2732
    %2788 = vmatprep.subr.bf16.mxu0 %v2729
    %2789 = vmatpush1.bf16.msra.mxu0 %v2728
    %2790 = vmatprep.subr.bf16.mxu0 %v2725
    %2791 = vmatpush1.bf16.msra.mxu0 %v2724
    %2792 = vmatprep.subr.bf16.mxu0 %v2721
    %2793 = vmatpush1.bf16.msra.mxu0 %v2720
    %2794 = vmatprep.subr.bf16.mxu0 %v2717
    %2795 = vmatpush1.bf16.msra.mxu0 %v2716
    %2796 = vmatprep.subr.bf16.mxu0 0
    %2797 = vmatpush2.bf16.msra.mxu0 0
    %2798 = vmatprep.subr.bf16.mxu0 0
    %2799 = vmatpush2.bf16.msra.mxu0 0
    %2800 = vmatprep.subr.bf16.mxu0 0
    %2801 = vmatpush2.bf16.msra.mxu0 0
    %2802 = vmatprep.subr.bf16.mxu0 0
    %2803 = vmatpush2.bf16.msra.mxu0 0
    %2804 = vmatprep.subr.bf16.mxu0 0
    %2805 = vmatpush2.bf16.msra.mxu0 0
    %2806 = vmatprep.subr.bf16.mxu0 0
    %2807 = vmatpush2.bf16.msra.mxu0 0
    %2808 = vmatprep.subr.bf16.mxu0 0
    %2809 = vmatpush2.bf16.msra.mxu0 0
    %2810 = vmatprep.subr.bf16.mxu0 0
    %2811 = vmatpush2.bf16.msra.mxu0 0
    %2812 = vmatprep.mubr.bf16.mxu0 0
    %2813 = vmatmul.mubr.bf16.gmra.mxu0 %v2587
    %v2814 = vpop.f32.mrf.mxu0
    %v2815 = vadd.f32 0.0, %v2814
    %v2816 = vpop.f32.mrf.mxu0
    %v2817 = vadd.f32 0.0, %v2816
    %v2818 = vpop.f32.mrf.mxu0
    %v2819 = vpop.f32.mrf.mxu0
    %2820 = vdwg.mxu0
    %2821 = vmatprep.subr.bf16.mxu0 %v2747
    %2822 = vmatpush1.bf16.msra.mxu0 %v2746
    %2823 = vmatprep.subr.bf16.mxu0 %v2743
    %2824 = vmatpush1.bf16.msra.mxu0 %v2742
    %2825 = vmatprep.subr.bf16.mxu0 %v2739
    %2826 = vmatpush1.bf16.msra.mxu0 %v2738
    %2827 = vmatprep.subr.bf16.mxu0 %v2735
    %2828 = vmatpush1.bf16.msra.mxu0 %v2734
    %2829 = vmatprep.subr.bf16.mxu0 %v2731
    %2830 = vmatpush1.bf16.msra.mxu0 %v2730
    %2831 = vmatprep.subr.bf16.mxu0 %v2727
    %2832 = vmatpush1.bf16.msra.mxu0 %v2726
    %2833 = vmatprep.subr.bf16.mxu0 %v2723
    %2834 = vmatpush1.bf16.msra.mxu0 %v2722
    %2835 = vmatprep.subr.bf16.mxu0 %v2719
    %2836 = vmatpush1.bf16.msra.mxu0 %v2718
    %2837 = vmatprep.subr.bf16.mxu0 0
    %2838 = vmatpush2.bf16.msra.mxu0 0
    %2839 = vmatprep.subr.bf16.mxu0 0
    %2840 = vmatpush2.bf16.msra.mxu0 0
    %2841 = vmatprep.subr.bf16.mxu0 0
    %2842 = vmatpush2.bf16.msra.mxu0 0
    %2843 = vmatprep.subr.bf16.mxu0 0
    %2844 = vmatpush2.bf16.msra.mxu0 0
    %2845 = vmatprep.subr.bf16.mxu0 0
    %2846 = vmatpush2.bf16.msra.mxu0 0
    %2847 = vmatprep.subr.bf16.mxu0 0
    %2848 = vmatpush2.bf16.msra.mxu0 0
    %2849 = vmatprep.subr.bf16.mxu0 0
    %2850 = vmatpush2.bf16.msra.mxu0 0
    %2851 = vmatprep.subr.bf16.mxu0 0
    %2852 = vmatpush2.bf16.msra.mxu0 0
    %2853 = vmatprep.mubr.bf16.mxu0 0
    %2854 = vmatmul.mubr.bf16.gmra.mxu0 %v2587
    %v2855 = vpop.f32.mrf.mxu0
    %v2856 = vadd.f32 0.0, %v2855
    %v2857 = vpop.f32.mrf.mxu0
    %v2858 = vadd.f32 0.0, %v2857
    %v2859 = vpop.f32.mrf.mxu0
    %v2860 = vpop.f32.mrf.mxu0
    %2861 = vdwg.mxu0
    %v2866 = vcombine.low %v2815, %v2817
    %v2867 = vcombine.low %v2856, %v2858
    %v2869 = vunpack.c.l.s4 1966171168
    %v2870 = vunpack.c.0.s8 %v2869
    %v2871 = vlaneseq
    %v2872 = vshrl.u32 %v2871, 7
    %v2873 = vsub.s32 %v2870, %v2872
    %v2874 = vrot.slane %v2866, %v2873
    %v2876 = vunpack.c.l.s4 1966171168
    %v2877 = vunpack.c.0.s8 %v2876
    %v2878 = vlaneseq
    %v2879 = vshrl.u32 %v2878, 7
    %v2880 = vsub.s32 %v2877, %v2879
    %v2881 = vrot.slane %v2867, %v2880
    %v2882 = vcombine.low %v2874, %v2881
    %v2884 = vunpack.c.l.s4 1966171168
    %v2885 = vunpack.c.0.s8 %v2884
    %v2886 = vlaneseq
    %v2887 = vshrl.u32 %v2886, 7
    %v2888 = vsub.s32 %v2885, %v2887
    %v2889 = vrot.slane %v2882, %v2888
    %v2891 = vadd.f32 %v2586, %v2889
    %v2892 = vxor.u32 %v2891, 2147483648
    %v2893 = vmul.f32 %v2892, 1.442695
    %v2894 = vpow.pop %v2893
    %v2895 = vadd.f32 %v2894, 1.0
    %v2896 = vrcp.pop %v2895
    %v2897 = vmul.f32 1.0, %v2896
    %v2899 = vrot.slane %v2891, 3
    %v2901 = vtanh.pop %v2899
    %v2903 = vrot.slane %v2897, 1
    %v2905 = vmul.f32 %v2903, %v2579
    %v2906 = vmul.f32 %v2897, %v2901
    %v2907 = vadd.f32 %v2905, %v2906
    %v2908 = vtanh.pop %v2907
    %v2909 = vrot.slane %v2897, 2
    %v2911 = vmul.f32 %v2909, %v2908
    %2912 = vst [vmem:[#allocation3 + $0x7] sm:$0x1] %v2911
    %v2913 = vld [vmem:[#allocation3] sm:$0xff]
    %v2914 = vld [vmem:[#allocation9] sm:$0xff]
    %v2915 = vld [vmem:[#allocation9 + $0x8] sm:$0xff]
    %v2916 = vld [vmem:[#allocation9 + $0x10] sm:$0xff]
    %v2917 = vld [vmem:[#allocation9 + $0x18] sm:$0xff]
    %v2918 = vld [vmem:[#allocation9 + $0x20] sm:$0xff]
    %v2919 = vld [vmem:[#allocation9 + $0x28] sm:$0xff]
    %v2920 = vld [vmem:[#allocation9 + $0x30] sm:$0xff]
    %v2921 = vld [vmem:[#allocation9 + $0x38] sm:$0xff]
    %v2922 = vld [vmem:[#allocation9 + $0x40] sm:$0xff]
    %v2923 = vld [vmem:[#allocation9 + $0x48] sm:$0xff]
    %v2924 = vld [vmem:[#allocation9 + $0x50] sm:$0xff]
    %v2925 = vld [vmem:[#allocation9 + $0x58] sm:$0xff]
    %v2926 = vld [vmem:[#allocation9 + $0x60] sm:$0xff]
    %v2927 = vld [vmem:[#allocation9 + $0x68] sm:$0xff]
    %v2928 = vld [vmem:[#allocation9 + $0x70] sm:$0xff]
    %v2929 = vld [vmem:[#allocation9 + $0x78] sm:$0xff]
    %v2930 = vld [vmem:[%s6] sm:$0x1]
    %v2932 = vlaneseq
    %v2933 = vshrl.u32 %v2932, 7
    %v2934 = vsub.s32 0, %v2933
    %v2935 = vrot.slane %v2930, %v2934
    %2937 = vmatprep.subr.mxu0 0.0
    %2938 = vmatpush1.msra.mxu0 %v2929
    %2939 = vmatprep.subr.mxu0 0.0
    %2940 = vmatpush1.msra.mxu0 %v2928
    %2941 = vmatprep.subr.mxu0 0.0
    %2942 = vmatpush1.msra.mxu0 %v2927
    %2943 = vmatprep.subr.mxu0 0.0
    %2944 = vmatpush1.msra.mxu0 %v2926
    %2945 = vmatprep.subr.mxu0 0.0
    %2946 = vmatpush1.msra.mxu0 %v2925
    %2947 = vmatprep.subr.mxu0 0.0
    %2948 = vmatpush1.msra.mxu0 %v2924
    %2949 = vmatprep.subr.mxu0 0.0
    %2950 = vmatpush1.msra.mxu0 %v2923
    %2951 = vmatprep.subr.mxu0 0.0
    %2952 = vmatpush1.msra.mxu0 %v2922
    %2953 = vmatprep.subr.mxu0 0.0
    %2954 = vmatpush1.msra.mxu0 %v2921
    %2955 = vmatprep.subr.mxu0 0.0
    %2956 = vmatpush1.msra.mxu0 %v2920
    %2957 = vmatprep.subr.mxu0 0.0
    %2958 = vmatpush1.msra.mxu0 %v2919
    %2959 = vmatprep.subr.mxu0 0.0
    %2960 = vmatpush1.msra.mxu0 %v2918
    %2961 = vmatprep.subr.mxu0 0.0
    %2962 = vmatpush1.msra.mxu0 %v2917
    %2963 = vmatprep.subr.mxu0 0.0
    %2964 = vmatpush1.msra.mxu0 %v2916
    %2965 = vmatprep.subr.mxu0 0.0
    %2966 = vmatpush1.msra.mxu0 %v2915
    %2967 = vmatprep.subr.mxu0 0.0
    %2968 = vmatpush1.msra.mxu0 %v2914
    %2969 = vmatprep.subr.mxu0 0.0
    %2970 = vmatpush2.msra.mxu0 0.0
    %2971 = vmatprep.subr.mxu0 0.0
    %2972 = vmatpush2.msra.mxu0 0.0
    %2973 = vmatprep.subr.mxu0 0.0
    %2974 = vmatpush2.msra.mxu0 0.0
    %2975 = vmatprep.subr.mxu0 0.0
    %2976 = vmatpush2.msra.mxu0 0.0
    %2977 = vmatprep.subr.mxu0 0.0
    %2978 = vmatpush2.msra.mxu0 0.0
    %2979 = vmatprep.subr.mxu0 0.0
    %2980 = vmatpush2.msra.mxu0 0.0
    %2981 = vmatprep.subr.mxu0 0.0
    %2982 = vmatpush2.msra.mxu0 0.0
    %2983 = vmatprep.subr.mxu0 0.0
    %2984 = vmatpush2.msra.mxu0 0.0
    %2985 = vmatprep.subr.mxu0 0.0
    %2986 = vmatpush2.msra.mxu0 0.0
    %2987 = vmatprep.subr.mxu0 0.0
    %2988 = vmatpush2.msra.mxu0 0.0
    %2989 = vmatprep.subr.mxu0 0.0
    %2990 = vmatpush2.msra.mxu0 0.0
    %2991 = vmatprep.subr.mxu0 0.0
    %2992 = vmatpush2.msra.mxu0 0.0
    %2993 = vmatprep.subr.mxu0 0.0
    %2994 = vmatpush2.msra.mxu0 0.0
    %2995 = vmatprep.subr.mxu0 0.0
    %2996 = vmatpush2.msra.mxu0 0.0
    %2997 = vmatprep.subr.mxu0 0.0
    %2998 = vmatpush2.msra.mxu0 0.0
    %2999 = vmatprep.subr.mxu0 0.0
    %3000 = vmatpush2.msra.mxu0 0.0
    %3001 = vmatprep.mubr.f32.mxu0 0.0
    %3002 = vmatmul.mubr.f32.gmra.mxu0 %v2913
    %v3003 = vpop.f32.mrf.mxu0
    %v3004 = vadd.f32 %v2935, %v3003
    %v3005 = vpop.f32.mrf.mxu0
    %3006 = vdwg.mxu0
    %3007 = vmax.xlane.f32.xlu0 %v3004
    %v3008 = vpop.xlane.xlu0 %3007
    %v3009 = vsub.f32 %v3004, %v3008
    %v3010 = vmul.f32 %v3009, 1.442695
    %v3011 = vpow.pop %v3010
    %3012 = vadd.xlane.f32.xlu0 %v3011
    %v3013 = vpop.xlane.xlu0 %3012
    %v3014 = vlog2.pop %v3013
    %v3015 = vmul.f32 %v3014, 0.6931472
    %v3016 = vsub.f32 %v3009, %v3015
    %3017 = vst [vmem:[#allocation10] sm:$0xff] %v3016
    // Predicated region
    $region42: #{tpu_custom_call.1} parent=1 // pred_check
      _
    $region43: #{tpu_custom_call.1} parent=1 // pred_check_branch
      %3019 = sbr.rel (0) target = $region45
    $region44: #{tpu_custom_call.1} parent=1 // pred_region
      %s3021 = ssub.s32 128, 128
      %3022 = vsyncadd [#allocation6], %s3021
      %s3024 = sshll.u32 [#allocation10], 4
      %s3025 = int_to_ptr.vmem [resolvable:$true] %s3024
      %3027 = dma.vmem_to_hbm [thread:$0]  %s3025, 128, %s7, [#allocation6]
    $region45: #{tpu_custom_call.1} parent=1 // pred_fallthru
      _
    // Predicated region
    $region46: #{tpu_custom_call.1} parent=1 // pred_check
      _
    $region47: #{tpu_custom_call.1} parent=1 // pred_check_branch
      %3029 = sbr.rel (0) target = $region49
    $region48: #{tpu_custom_call.1} parent=1 // pred_region
      %3030 = dma.done [#allocation6], 128
    $region49: #{tpu_custom_call.1} parent=1 // pred_fallthru
      _
    %3031 = vsyncpa [#allocation5], 1
    %3032 = vsyncpa [#allocation8], 1
    %3033 = vsyncpa [#allocation6], 1

</llo_original>
